<compile_context>
chip_gen: v6e
topology: v6e:2x2x1
jax: 0.10.0
libtpu: 0.0.40
codegen_flags: <defaults>
</compile_context>

<pallas_src>
import numpy as np
import jax
import jax.numpy as jnp
from jax.experimental import pallas as pl
from jax.experimental.pallas import tpu as pltpu

N = 8          # variable dimension (z in R^N)
M = 4          # number of equality constraints
K = N + M      # KKT system size
BT = 128       # batch tile mapped to the 128-lane axis

# Packed per-problem parameter layout (length P), row-major flattening:
#   [ Q_sqrt (N*N) | A (M*N) | p (N) | b (M) ]
OFF_QS = 0
OFF_A = OFF_QS + N * N          # 64
OFF_P = OFF_A + M * N           # 96
OFF_B = OFF_P + N               # 104
P = OFF_B + M                   # 108


def _optlayer_kernel(par_ref, out_ref):
    """Solve BT=128 KKT systems at once (one per lane); emit y_z = z - dz."""
    f32 = jnp.float32
    slab = par_ref[0]            # (P, BT): all parameters, batch on lanes

    # Static, sublane-aligned unpacking (offsets 0, 8, ..., 96, 104).
    qs_rows = [slab[OFF_QS + r * N: OFF_QS + (r + 1) * N, :] for r in range(N)]  # (N,BT)
    a_rows = [slab[OFF_A + j * N: OFF_A + (j + 1) * N, :] for j in range(M)]     # (N,BT)
    p = slab[OFF_P:OFF_P + N, :]     # (N, BT)
    b = slab[OFF_B:OFF_B + M, :]     # (M, BT)

    # --- Q = Q_sqrt^T Q_sqrt, row by row on the VPU (128 problems per op; no MXU) ---
    q_rows = []
    for i in range(N):
        acc = qs_rows[0][i:i + 1, :] * qs_rows[0]
        for r in range(1, N):
            acc = acc + qs_rows[r][i:i + 1, :] * qs_rows[r]
        q_rows.append(acc)                  # (N, BT): row i of Q (== col i, symmetric)

    # --- assemble augmented KKT rows [[Q, A^T, -p], [A, 0, b]]; each (K+1, BT) ---
    zeros_mm = jnp.zeros((M, BT), f32)
    rows = []
    for i in range(N):                      # stationarity rows: [Q_i | (A^T)_i | -p_i]
        pieces = ([q_rows[i]]
                  + [a_rows[j][i:i + 1, :] for j in range(M)]   # (A^T)_i = A[:, i]
                  + [-p[i:i + 1, :]])
        rows.append(jnp.concatenate(pieces, axis=0))
    for j in range(M):                      # primal feasibility: [A_j | 0 | b_j]
        rows.append(jnp.concatenate([a_rows[j], zeros_mm, b[j:j + 1, :]], axis=0))

    # --- Gauss-Jordan elimination, fully unrolled (K static, pivots nonzero). ---
    for k in range(K):
        pivot_row = rows[k]                                       # (K+1, BT)
        inv = pl.reciprocal(pivot_row[k:k + 1, :], approx=False)  # (1, BT)
        new_row = pivot_row * inv
        rows = [new_row if i == k else rows[i] - rows[i][k:k + 1, :] * new_row
                for i in range(K)]

    sol = [rows[i][K:K + 1, :] for i in range(K)]                 # K x (1, BT)
    z = jnp.concatenate(sol[:N], axis=0)                          # (N, BT)

    # --- dz = Q z + p + A^T nu (KKT stationarity), exactly as OptLayer.kkt() ---
    qz = q_rows[0] * sol[0]
    for j in range(1, N):
        qz = qz + q_rows[j] * sol[j]          # Q symmetric: column j == row j
    atnu = a_rows[0] * sol[N]
    for j in range(1, M):
        atnu = atnu + a_rows[j] * sol[N + j]  # (A^T nu) = sum_j A[j,:] * nu_j
    out_ref[0] = z - (qz + p + atnu)          # lane-dense (N, BT) store


@jax.jit
def opt_layer_forward(q_sqrt, p, a, b):
    """q_sqrt: (B,N,N), p: (B,N), a: (B,M,N), b: (B,M)  ->  z_out: (B,N)."""
    f32 = jnp.float32
    bsz = q_sqrt.shape[0]
    g = -(-bsz // BT)              # ceil-div: number of grid steps
    pad = g * BT - bsz

    packed = jnp.concatenate(
        [q_sqrt.astype(f32).reshape(bsz, N * N),
         a.astype(f32).reshape(bsz, M * N),
         p.astype(f32).reshape(bsz, N),
         b.astype(f32).reshape(bsz, M)], axis=1)          # (B, P)

    if pad:
        # Pad with a trivially solvable problem (Q_sqrt = I, A = [I_M | 0], p = b = 0)
        # so the padded lanes stay finite; they are dropped after the kernel.
        pad_vec = jnp.concatenate(
            [jnp.eye(N, dtype=f32).reshape(-1),
             jnp.eye(M, N, dtype=f32).reshape(-1),
             jnp.zeros((N,), f32),
             jnp.zeros((M,), f32)])
        packed = jnp.concatenate(
            [packed, jnp.broadcast_to(pad_vec, (pad, P))], axis=0)

    # batch on the minor (lane) axis: (g*BT, P) -> (g, P, BT)
    packed = jnp.transpose(packed.reshape(g, BT, P), (0, 2, 1))

    out = pl.pallas_call(
        _optlayer_kernel,
        out_shape=jax.ShapeDtypeStruct((g, N, BT), f32),
        grid_spec=pltpu.PrefetchScalarGridSpec(
            num_scalar_prefetch=0,
            grid=(g,),
            in_specs=[pl.BlockSpec((1, P, BT), lambda i: (i, 0, 0))],   # one DMA/step
            out_specs=pl.BlockSpec((1, N, BT), lambda i: (i, 0, 0)),
        ),
        compiler_params=pltpu.CompilerParams(
            dimension_semantics=("parallel",)),
    )(packed)

    out = jnp.transpose(out, (0, 2, 1)).reshape(g * BT, N)
    return out[:bsz]


def _reference(q_sqrt, p, a, b):
    """Plain NumPy float64 reference of the same forward semantics."""
    q_sqrt = np.asarray(q_sqrt, np.float64)
    p = np.asarray(p, np.float64)
    a = np.asarray(a, np.float64)
    b = np.asarray(b, np.float64)
    outs = []
    for i in range(q_sqrt.shape[0]):
        Q = q_sqrt[i].T @ q_sqrt[i]
        Mk = np.block([[Q, a[i].T], [a[i], np.zeros((M, M))]])
        rhs = np.concatenate([-p[i], b[i]])
        sol = np.linalg.solve(Mk, rhs)
        z, nu = sol[:N], sol[N:]
        dz = Q @ z + p[i] + a[i].T @ nu
        outs.append(z - dz)
    return np.stack(outs, axis=0)


if __name__ == "__main__":
    B = 2   # small demo batch (padded to BT=128 lanes internally)
    key = jax.random.PRNGKey(0)
    k0, k1, k2, k3 = jax.random.split(key, 4)
    # Deterministic, well-conditioned problem parameters.
    q_sqrt = 0.1 * jax.random.normal(k0, (B, N, N), jnp.float32) \
        + jnp.eye(N, dtype=jnp.float32)[None]
    p = jax.random.normal(k1, (B, N), jnp.float32)
    a = jax.random.normal(k2, (B, M, N), jnp.float32)
    b = jax.random.normal(k3, (B, M), jnp.float32)

    z_out = opt_layer_forward(q_sqrt, p, a, b)
    z_out = jax.block_until_ready(z_out)

    ref = _reference(q_sqrt, p, a, b)
    assert z_out.shape == (B, N)
    np.testing.assert_allclose(np.asarray(z_out), ref, rtol=5e-3, atol=5e-3)
    print("KERNEL_OK")
</pallas_src>

<mosaic_0001>
module attributes {stable_mosaic.version = 11 : i64} {
  func.func @_optlayer_kernel(%arg0: i32, %arg1: memref<1x108x128xf32, #tpu.memory_space<vmem>>, %arg2: memref<1x8x128xf32, #tpu.memory_space<vmem>>) attributes {dimension_semantics = [#tpu.dimension_semantics<parallel>], iteration_bounds = array<i64: 1>, scalar_prefetch = 0 : i64, scratch_operands = 0 : i64, tpu.core_type = #tpu.core_type<tc>, window_params = [{transform_indices = @transform_0, window_bounds = array<i64: 1, 108, 128>}, {transform_indices = @transform_1, window_bounds = array<i64: 1, 8, 128>}]} {
    %c0 = arith.constant 0 : index
    %c0_0 = arith.constant 0 : index
    %c0_1 = arith.constant 0 : index
    %0 = vector.load %arg1[%c0, %c0_0, %c0_1] : memref<1x108x128xf32, #tpu.memory_space<vmem>>, vector<1x108x128xf32>
    %1 = vector.shape_cast %0 : vector<1x108x128xf32> to vector<108x128xf32>
    %2 = vector.extract_strided_slice %1 {offsets = [0, 0], sizes = [8, 128], strides = [1, 1]} : vector<108x128xf32> to vector<8x128xf32>
    %3 = vector.extract_strided_slice %1 {offsets = [8, 0], sizes = [8, 128], strides = [1, 1]} : vector<108x128xf32> to vector<8x128xf32>
    %4 = vector.extract_strided_slice %1 {offsets = [16, 0], sizes = [8, 128], strides = [1, 1]} : vector<108x128xf32> to vector<8x128xf32>
    %5 = vector.extract_strided_slice %1 {offsets = [24, 0], sizes = [8, 128], strides = [1, 1]} : vector<108x128xf32> to vector<8x128xf32>
    %6 = vector.extract_strided_slice %1 {offsets = [32, 0], sizes = [8, 128], strides = [1, 1]} : vector<108x128xf32> to vector<8x128xf32>
    %7 = vector.extract_strided_slice %1 {offsets = [40, 0], sizes = [8, 128], strides = [1, 1]} : vector<108x128xf32> to vector<8x128xf32>
    %8 = vector.extract_strided_slice %1 {offsets = [48, 0], sizes = [8, 128], strides = [1, 1]} : vector<108x128xf32> to vector<8x128xf32>
    %9 = vector.extract_strided_slice %1 {offsets = [56, 0], sizes = [8, 128], strides = [1, 1]} : vector<108x128xf32> to vector<8x128xf32>
    %10 = vector.extract_strided_slice %1 {offsets = [64, 0], sizes = [8, 128], strides = [1, 1]} : vector<108x128xf32> to vector<8x128xf32>
    %11 = vector.extract_strided_slice %1 {offsets = [72, 0], sizes = [8, 128], strides = [1, 1]} : vector<108x128xf32> to vector<8x128xf32>
    %12 = vector.extract_strided_slice %1 {offsets = [80, 0], sizes = [8, 128], strides = [1, 1]} : vector<108x128xf32> to vector<8x128xf32>
    %13 = vector.extract_strided_slice %1 {offsets = [88, 0], sizes = [8, 128], strides = [1, 1]} : vector<108x128xf32> to vector<8x128xf32>
    %14 = vector.extract_strided_slice %1 {offsets = [96, 0], sizes = [8, 128], strides = [1, 1]} : vector<108x128xf32> to vector<8x128xf32>
    %15 = vector.extract_strided_slice %1 {offsets = [104, 0], sizes = [4, 128], strides = [1, 1]} : vector<108x128xf32> to vector<4x128xf32>
    %16 = vector.extract_strided_slice %2 {offsets = [0, 0], sizes = [1, 128], strides = [1, 1]} : vector<8x128xf32> to vector<1x128xf32>
    %17 = vector.broadcast %16 : vector<1x128xf32> to vector<8x128xf32>
    %18 = arith.mulf %17, %2 : vector<8x128xf32>
    %19 = vector.extract_strided_slice %3 {offsets = [0, 0], sizes = [1, 128], strides = [1, 1]} : vector<8x128xf32> to vector<1x128xf32>
    %20 = vector.broadcast %19 : vector<1x128xf32> to vector<8x128xf32>
    %21 = arith.mulf %20, %3 : vector<8x128xf32>
    %22 = arith.addf %18, %21 : vector<8x128xf32>
    %23 = vector.extract_strided_slice %4 {offsets = [0, 0], sizes = [1, 128], strides = [1, 1]} : vector<8x128xf32> to vector<1x128xf32>
    %24 = vector.broadcast %23 : vector<1x128xf32> to vector<8x128xf32>
    %25 = arith.mulf %24, %4 : vector<8x128xf32>
    %26 = arith.addf %22, %25 : vector<8x128xf32>
    %27 = vector.extract_strided_slice %5 {offsets = [0, 0], sizes = [1, 128], strides = [1, 1]} : vector<8x128xf32> to vector<1x128xf32>
    %28 = vector.broadcast %27 : vector<1x128xf32> to vector<8x128xf32>
    %29 = arith.mulf %28, %5 : vector<8x128xf32>
    %30 = arith.addf %26, %29 : vector<8x128xf32>
    %31 = vector.extract_strided_slice %6 {offsets = [0, 0], sizes = [1, 128], strides = [1, 1]} : vector<8x128xf32> to vector<1x128xf32>
    %32 = vector.broadcast %31 : vector<1x128xf32> to vector<8x128xf32>
    %33 = arith.mulf %32, %6 : vector<8x128xf32>
    %34 = arith.addf %30, %33 : vector<8x128xf32>
    %35 = vector.extract_strided_slice %7 {offsets = [0, 0], sizes = [1, 128], strides = [1, 1]} : vector<8x128xf32> to vector<1x128xf32>
    %36 = vector.broadcast %35 : vector<1x128xf32> to vector<8x128xf32>
    %37 = arith.mulf %36, %7 : vector<8x128xf32>
    %38 = arith.addf %34, %37 : vector<8x128xf32>
    %39 = vector.extract_strided_slice %8 {offsets = [0, 0], sizes = [1, 128], strides = [1, 1]} : vector<8x128xf32> to vector<1x128xf32>
    %40 = vector.broadcast %39 : vector<1x128xf32> to vector<8x128xf32>
    %41 = arith.mulf %40, %8 : vector<8x128xf32>
    %42 = arith.addf %38, %41 : vector<8x128xf32>
    %43 = vector.extract_strided_slice %9 {offsets = [0, 0], sizes = [1, 128], strides = [1, 1]} : vector<8x128xf32> to vector<1x128xf32>
    %44 = vector.broadcast %43 : vector<1x128xf32> to vector<8x128xf32>
    %45 = arith.mulf %44, %9 : vector<8x128xf32>
    %46 = arith.addf %42, %45 : vector<8x128xf32>
    %47 = vector.extract_strided_slice %2 {offsets = [1, 0], sizes = [1, 128], strides = [1, 1]} : vector<8x128xf32> to vector<1x128xf32>
    %48 = vector.broadcast %47 : vector<1x128xf32> to vector<8x128xf32>
    %49 = arith.mulf %48, %2 : vector<8x128xf32>
    %50 = vector.extract_strided_slice %3 {offsets = [1, 0], sizes = [1, 128], strides = [1, 1]} : vector<8x128xf32> to vector<1x128xf32>
    %51 = vector.broadcast %50 : vector<1x128xf32> to vector<8x128xf32>
    %52 = arith.mulf %51, %3 : vector<8x128xf32>
    %53 = arith.addf %49, %52 : vector<8x128xf32>
    %54 = vector.extract_strided_slice %4 {offsets = [1, 0], sizes = [1, 128], strides = [1, 1]} : vector<8x128xf32> to vector<1x128xf32>
    %55 = vector.broadcast %54 : vector<1x128xf32> to vector<8x128xf32>
    %56 = arith.mulf %55, %4 : vector<8x128xf32>
    %57 = arith.addf %53, %56 : vector<8x128xf32>
    %58 = vector.extract_strided_slice %5 {offsets = [1, 0], sizes = [1, 128], strides = [1, 1]} : vector<8x128xf32> to vector<1x128xf32>
    %59 = vector.broadcast %58 : vector<1x128xf32> to vector<8x128xf32>
    %60 = arith.mulf %59, %5 : vector<8x128xf32>
    %61 = arith.addf %57, %60 : vector<8x128xf32>
    %62 = vector.extract_strided_slice %6 {offsets = [1, 0], sizes = [1, 128], strides = [1, 1]} : vector<8x128xf32> to vector<1x128xf32>
    %63 = vector.broadcast %62 : vector<1x128xf32> to vector<8x128xf32>
    %64 = arith.mulf %63, %6 : vector<8x128xf32>
    %65 = arith.addf %61, %64 : vector<8x128xf32>
    %66 = vector.extract_strided_slice %7 {offsets = [1, 0], sizes = [1, 128], strides = [1, 1]} : vector<8x128xf32> to vector<1x128xf32>
    %67 = vector.broadcast %66 : vector<1x128xf32> to vector<8x128xf32>
    %68 = arith.mulf %67, %7 : vector<8x128xf32>
    %69 = arith.addf %65, %68 : vector<8x128xf32>
    %70 = vector.extract_strided_slice %8 {offsets = [1, 0], sizes = [1, 128], strides = [1, 1]} : vector<8x128xf32> to vector<1x128xf32>
    %71 = vector.broadcast %70 : vector<1x128xf32> to vector<8x128xf32>
    %72 = arith.mulf %71, %8 : vector<8x128xf32>
    %73 = arith.addf %69, %72 : vector<8x128xf32>
    %74 = vector.extract_strided_slice %9 {offsets = [1, 0], sizes = [1, 128], strides = [1, 1]} : vector<8x128xf32> to vector<1x128xf32>
    %75 = vector.broadcast %74 : vector<1x128xf32> to vector<8x128xf32>
    %76 = arith.mulf %75, %9 : vector<8x128xf32>
    %77 = arith.addf %73, %76 : vector<8x128xf32>
    %78 = vector.extract_strided_slice %2 {offsets = [2, 0], sizes = [1, 128], strides = [1, 1]} : vector<8x128xf32> to vector<1x128xf32>
    %79 = vector.broadcast %78 : vector<1x128xf32> to vector<8x128xf32>
    %80 = arith.mulf %79, %2 : vector<8x128xf32>
    %81 = vector.extract_strided_slice %3 {offsets = [2, 0], sizes = [1, 128], strides = [1, 1]} : vector<8x128xf32> to vector<1x128xf32>
    %82 = vector.broadcast %81 : vector<1x128xf32> to vector<8x128xf32>
    %83 = arith.mulf %82, %3 : vector<8x128xf32>
    %84 = arith.addf %80, %83 : vector<8x128xf32>
    %85 = vector.extract_strided_slice %4 {offsets = [2, 0], sizes = [1, 128], strides = [1, 1]} : vector<8x128xf32> to vector<1x128xf32>
    %86 = vector.broadcast %85 : vector<1x128xf32> to vector<8x128xf32>
    %87 = arith.mulf %86, %4 : vector<8x128xf32>
    %88 = arith.addf %84, %87 : vector<8x128xf32>
    %89 = vector.extract_strided_slice %5 {offsets = [2, 0], sizes = [1, 128], strides = [1, 1]} : vector<8x128xf32> to vector<1x128xf32>
    %90 = vector.broadcast %89 : vector<1x128xf32> to vector<8x128xf32>
    %91 = arith.mulf %90, %5 : vector<8x128xf32>
    %92 = arith.addf %88, %91 : vector<8x128xf32>
    %93 = vector.extract_strided_slice %6 {offsets = [2, 0], sizes = [1, 128], strides = [1, 1]} : vector<8x128xf32> to vector<1x128xf32>
    %94 = vector.broadcast %93 : vector<1x128xf32> to vector<8x128xf32>
    %95 = arith.mulf %94, %6 : vector<8x128xf32>
    %96 = arith.addf %92, %95 : vector<8x128xf32>
    %97 = vector.extract_strided_slice %7 {offsets = [2, 0], sizes = [1, 128], strides = [1, 1]} : vector<8x128xf32> to vector<1x128xf32>
    %98 = vector.broadcast %97 : vector<1x128xf32> to vector<8x128xf32>
    %99 = arith.mulf %98, %7 : vector<8x128xf32>
    %100 = arith.addf %96, %99 : vector<8x128xf32>
    %101 = vector.extract_strided_slice %8 {offsets = [2, 0], sizes = [1, 128], strides = [1, 1]} : vector<8x128xf32> to vector<1x128xf32>
    %102 = vector.broadcast %101 : vector<1x128xf32> to vector<8x128xf32>
    %103 = arith.mulf %102, %8 : vector<8x128xf32>
    %104 = arith.addf %100, %103 : vector<8x128xf32>
    %105 = vector.extract_strided_slice %9 {offsets = [2, 0], sizes = [1, 128], strides = [1, 1]} : vector<8x128xf32> to vector<1x128xf32>
    %106 = vector.broadcast %105 : vector<1x128xf32> to vector<8x128xf32>
    %107 = arith.mulf %106, %9 : vector<8x128xf32>
    %108 = arith.addf %104, %107 : vector<8x128xf32>
    %109 = vector.extract_strided_slice %2 {offsets = [3, 0], sizes = [1, 128], strides = [1, 1]} : vector<8x128xf32> to vector<1x128xf32>
    %110 = vector.broadcast %109 : vector<1x128xf32> to vector<8x128xf32>
    %111 = arith.mulf %110, %2 : vector<8x128xf32>
    %112 = vector.extract_strided_slice %3 {offsets = [3, 0], sizes = [1, 128], strides = [1, 1]} : vector<8x128xf32> to vector<1x128xf32>
    %113 = vector.broadcast %112 : vector<1x128xf32> to vector<8x128xf32>
    %114 = arith.mulf %113, %3 : vector<8x128xf32>
    %115 = arith.addf %111, %114 : vector<8x128xf32>
    %116 = vector.extract_strided_slice %4 {offsets = [3, 0], sizes = [1, 128], strides = [1, 1]} : vector<8x128xf32> to vector<1x128xf32>
    %117 = vector.broadcast %116 : vector<1x128xf32> to vector<8x128xf32>
    %118 = arith.mulf %117, %4 : vector<8x128xf32>
    %119 = arith.addf %115, %118 : vector<8x128xf32>
    %120 = vector.extract_strided_slice %5 {offsets = [3, 0], sizes = [1, 128], strides = [1, 1]} : vector<8x128xf32> to vector<1x128xf32>
    %121 = vector.broadcast %120 : vector<1x128xf32> to vector<8x128xf32>
    %122 = arith.mulf %121, %5 : vector<8x128xf32>
    %123 = arith.addf %119, %122 : vector<8x128xf32>
    %124 = vector.extract_strided_slice %6 {offsets = [3, 0], sizes = [1, 128], strides = [1, 1]} : vector<8x128xf32> to vector<1x128xf32>
    %125 = vector.broadcast %124 : vector<1x128xf32> to vector<8x128xf32>
    %126 = arith.mulf %125, %6 : vector<8x128xf32>
    %127 = arith.addf %123, %126 : vector<8x128xf32>
    %128 = vector.extract_strided_slice %7 {offsets = [3, 0], sizes = [1, 128], strides = [1, 1]} : vector<8x128xf32> to vector<1x128xf32>
    %129 = vector.broadcast %128 : vector<1x128xf32> to vector<8x128xf32>
    %130 = arith.mulf %129, %7 : vector<8x128xf32>
    %131 = arith.addf %127, %130 : vector<8x128xf32>
    %132 = vector.extract_strided_slice %8 {offsets = [3, 0], sizes = [1, 128], strides = [1, 1]} : vector<8x128xf32> to vector<1x128xf32>
    %133 = vector.broadcast %132 : vector<1x128xf32> to vector<8x128xf32>
    %134 = arith.mulf %133, %8 : vector<8x128xf32>
    %135 = arith.addf %131, %134 : vector<8x128xf32>
    %136 = vector.extract_strided_slice %9 {offsets = [3, 0], sizes = [1, 128], strides = [1, 1]} : vector<8x128xf32> to vector<1x128xf32>
    %137 = vector.broadcast %136 : vector<1x128xf32> to vector<8x128xf32>
    %138 = arith.mulf %137, %9 : vector<8x128xf32>
    %139 = arith.addf %135, %138 : vector<8x128xf32>
    %140 = vector.extract_strided_slice %2 {offsets = [4, 0], sizes = [1, 128], strides = [1, 1]} : vector<8x128xf32> to vector<1x128xf32>
    %141 = vector.broadcast %140 : vector<1x128xf32> to vector<8x128xf32>
    %142 = arith.mulf %141, %2 : vector<8x128xf32>
    %143 = vector.extract_strided_slice %3 {offsets = [4, 0], sizes = [1, 128], strides = [1, 1]} : vector<8x128xf32> to vector<1x128xf32>
    %144 = vector.broadcast %143 : vector<1x128xf32> to vector<8x128xf32>
    %145 = arith.mulf %144, %3 : vector<8x128xf32>
    %146 = arith.addf %142, %145 : vector<8x128xf32>
    %147 = vector.extract_strided_slice %4 {offsets = [4, 0], sizes = [1, 128], strides = [1, 1]} : vector<8x128xf32> to vector<1x128xf32>
    %148 = vector.broadcast %147 : vector<1x128xf32> to vector<8x128xf32>
    %149 = arith.mulf %148, %4 : vector<8x128xf32>
    %150 = arith.addf %146, %149 : vector<8x128xf32>
    %151 = vector.extract_strided_slice %5 {offsets = [4, 0], sizes = [1, 128], strides = [1, 1]} : vector<8x128xf32> to vector<1x128xf32>
    %152 = vector.broadcast %151 : vector<1x128xf32> to vector<8x128xf32>
    %153 = arith.mulf %152, %5 : vector<8x128xf32>
    %154 = arith.addf %150, %153 : vector<8x128xf32>
    %155 = vector.extract_strided_slice %6 {offsets = [4, 0], sizes = [1, 128], strides = [1, 1]} : vector<8x128xf32> to vector<1x128xf32>
    %156 = vector.broadcast %155 : vector<1x128xf32> to vector<8x128xf32>
    %157 = arith.mulf %156, %6 : vector<8x128xf32>
    %158 = arith.addf %154, %157 : vector<8x128xf32>
    %159 = vector.extract_strided_slice %7 {offsets = [4, 0], sizes = [1, 128], strides = [1, 1]} : vector<8x128xf32> to vector<1x128xf32>
    %160 = vector.broadcast %159 : vector<1x128xf32> to vector<8x128xf32>
    %161 = arith.mulf %160, %7 : vector<8x128xf32>
    %162 = arith.addf %158, %161 : vector<8x128xf32>
    %163 = vector.extract_strided_slice %8 {offsets = [4, 0], sizes = [1, 128], strides = [1, 1]} : vector<8x128xf32> to vector<1x128xf32>
    %164 = vector.broadcast %163 : vector<1x128xf32> to vector<8x128xf32>
    %165 = arith.mulf %164, %8 : vector<8x128xf32>
    %166 = arith.addf %162, %165 : vector<8x128xf32>
    %167 = vector.extract_strided_slice %9 {offsets = [4, 0], sizes = [1, 128], strides = [1, 1]} : vector<8x128xf32> to vector<1x128xf32>
    %168 = vector.broadcast %167 : vector<1x128xf32> to vector<8x128xf32>
    %169 = arith.mulf %168, %9 : vector<8x128xf32>
    %170 = arith.addf %166, %169 : vector<8x128xf32>
    %171 = vector.extract_strided_slice %2 {offsets = [5, 0], sizes = [1, 128], strides = [1, 1]} : vector<8x128xf32> to vector<1x128xf32>
    %172 = vector.broadcast %171 : vector<1x128xf32> to vector<8x128xf32>
    %173 = arith.mulf %172, %2 : vector<8x128xf32>
    %174 = vector.extract_strided_slice %3 {offsets = [5, 0], sizes = [1, 128], strides = [1, 1]} : vector<8x128xf32> to vector<1x128xf32>
    %175 = vector.broadcast %174 : vector<1x128xf32> to vector<8x128xf32>
    %176 = arith.mulf %175, %3 : vector<8x128xf32>
    %177 = arith.addf %173, %176 : vector<8x128xf32>
    %178 = vector.extract_strided_slice %4 {offsets = [5, 0], sizes = [1, 128], strides = [1, 1]} : vector<8x128xf32> to vector<1x128xf32>
    %179 = vector.broadcast %178 : vector<1x128xf32> to vector<8x128xf32>
    %180 = arith.mulf %179, %4 : vector<8x128xf32>
    %181 = arith.addf %177, %180 : vector<8x128xf32>
    %182 = vector.extract_strided_slice %5 {offsets = [5, 0], sizes = [1, 128], strides = [1, 1]} : vector<8x128xf32> to vector<1x128xf32>
    %183 = vector.broadcast %182 : vector<1x128xf32> to vector<8x128xf32>
    %184 = arith.mulf %183, %5 : vector<8x128xf32>
    %185 = arith.addf %181, %184 : vector<8x128xf32>
    %186 = vector.extract_strided_slice %6 {offsets = [5, 0], sizes = [1, 128], strides = [1, 1]} : vector<8x128xf32> to vector<1x128xf32>
    %187 = vector.broadcast %186 : vector<1x128xf32> to vector<8x128xf32>
    %188 = arith.mulf %187, %6 : vector<8x128xf32>
    %189 = arith.addf %185, %188 : vector<8x128xf32>
    %190 = vector.extract_strided_slice %7 {offsets = [5, 0], sizes = [1, 128], strides = [1, 1]} : vector<8x128xf32> to vector<1x128xf32>
    %191 = vector.broadcast %190 : vector<1x128xf32> to vector<8x128xf32>
    %192 = arith.mulf %191, %7 : vector<8x128xf32>
    %193 = arith.addf %189, %192 : vector<8x128xf32>
    %194 = vector.extract_strided_slice %8 {offsets = [5, 0], sizes = [1, 128], strides = [1, 1]} : vector<8x128xf32> to vector<1x128xf32>
    %195 = vector.broadcast %194 : vector<1x128xf32> to vector<8x128xf32>
    %196 = arith.mulf %195, %8 : vector<8x128xf32>
    %197 = arith.addf %193, %196 : vector<8x128xf32>
    %198 = vector.extract_strided_slice %9 {offsets = [5, 0], sizes = [1, 128], strides = [1, 1]} : vector<8x128xf32> to vector<1x128xf32>
    %199 = vector.broadcast %198 : vector<1x128xf32> to vector<8x128xf32>
    %200 = arith.mulf %199, %9 : vector<8x128xf32>
    %201 = arith.addf %197, %200 : vector<8x128xf32>
    %202 = vector.extract_strided_slice %2 {offsets = [6, 0], sizes = [1, 128], strides = [1, 1]} : vector<8x128xf32> to vector<1x128xf32>
    %203 = vector.broadcast %202 : vector<1x128xf32> to vector<8x128xf32>
    %204 = arith.mulf %203, %2 : vector<8x128xf32>
    %205 = vector.extract_strided_slice %3 {offsets = [6, 0], sizes = [1, 128], strides = [1, 1]} : vector<8x128xf32> to vector<1x128xf32>
    %206 = vector.broadcast %205 : vector<1x128xf32> to vector<8x128xf32>
    %207 = arith.mulf %206, %3 : vector<8x128xf32>
    %208 = arith.addf %204, %207 : vector<8x128xf32>
    %209 = vector.extract_strided_slice %4 {offsets = [6, 0], sizes = [1, 128], strides = [1, 1]} : vector<8x128xf32> to vector<1x128xf32>
    %210 = vector.broadcast %209 : vector<1x128xf32> to vector<8x128xf32>
    %211 = arith.mulf %210, %4 : vector<8x128xf32>
    %212 = arith.addf %208, %211 : vector<8x128xf32>
    %213 = vector.extract_strided_slice %5 {offsets = [6, 0], sizes = [1, 128], strides = [1, 1]} : vector<8x128xf32> to vector<1x128xf32>
    %214 = vector.broadcast %213 : vector<1x128xf32> to vector<8x128xf32>
    %215 = arith.mulf %214, %5 : vector<8x128xf32>
    %216 = arith.addf %212, %215 : vector<8x128xf32>
    %217 = vector.extract_strided_slice %6 {offsets = [6, 0], sizes = [1, 128], strides = [1, 1]} : vector<8x128xf32> to vector<1x128xf32>
    %218 = vector.broadcast %217 : vector<1x128xf32> to vector<8x128xf32>
    %219 = arith.mulf %218, %6 : vector<8x128xf32>
    %220 = arith.addf %216, %219 : vector<8x128xf32>
    %221 = vector.extract_strided_slice %7 {offsets = [6, 0], sizes = [1, 128], strides = [1, 1]} : vector<8x128xf32> to vector<1x128xf32>
    %222 = vector.broadcast %221 : vector<1x128xf32> to vector<8x128xf32>
    %223 = arith.mulf %222, %7 : vector<8x128xf32>
    %224 = arith.addf %220, %223 : vector<8x128xf32>
    %225 = vector.extract_strided_slice %8 {offsets = [6, 0], sizes = [1, 128], strides = [1, 1]} : vector<8x128xf32> to vector<1x128xf32>
    %226 = vector.broadcast %225 : vector<1x128xf32> to vector<8x128xf32>
    %227 = arith.mulf %226, %8 : vector<8x128xf32>
    %228 = arith.addf %224, %227 : vector<8x128xf32>
    %229 = vector.extract_strided_slice %9 {offsets = [6, 0], sizes = [1, 128], strides = [1, 1]} : vector<8x128xf32> to vector<1x128xf32>
    %230 = vector.broadcast %229 : vector<1x128xf32> to vector<8x128xf32>
    %231 = arith.mulf %230, %9 : vector<8x128xf32>
    %232 = arith.addf %228, %231 : vector<8x128xf32>
    %233 = vector.extract_strided_slice %2 {offsets = [7, 0], sizes = [1, 128], strides = [1, 1]} : vector<8x128xf32> to vector<1x128xf32>
    %234 = vector.broadcast %233 : vector<1x128xf32> to vector<8x128xf32>
    %235 = arith.mulf %234, %2 : vector<8x128xf32>
    %236 = vector.extract_strided_slice %3 {offsets = [7, 0], sizes = [1, 128], strides = [1, 1]} : vector<8x128xf32> to vector<1x128xf32>
    %237 = vector.broadcast %236 : vector<1x128xf32> to vector<8x128xf32>
    %238 = arith.mulf %237, %3 : vector<8x128xf32>
    %239 = arith.addf %235, %238 : vector<8x128xf32>
    %240 = vector.extract_strided_slice %4 {offsets = [7, 0], sizes = [1, 128], strides = [1, 1]} : vector<8x128xf32> to vector<1x128xf32>
    %241 = vector.broadcast %240 : vector<1x128xf32> to vector<8x128xf32>
    %242 = arith.mulf %241, %4 : vector<8x128xf32>
    %243 = arith.addf %239, %242 : vector<8x128xf32>
    %244 = vector.extract_strided_slice %5 {offsets = [7, 0], sizes = [1, 128], strides = [1, 1]} : vector<8x128xf32> to vector<1x128xf32>
    %245 = vector.broadcast %244 : vector<1x128xf32> to vector<8x128xf32>
    %246 = arith.mulf %245, %5 : vector<8x128xf32>
    %247 = arith.addf %243, %246 : vector<8x128xf32>
    %248 = vector.extract_strided_slice %6 {offsets = [7, 0], sizes = [1, 128], strides = [1, 1]} : vector<8x128xf32> to vector<1x128xf32>
    %249 = vector.broadcast %248 : vector<1x128xf32> to vector<8x128xf32>
    %250 = arith.mulf %249, %6 : vector<8x128xf32>
    %251 = arith.addf %247, %250 : vector<8x128xf32>
    %252 = vector.extract_strided_slice %7 {offsets = [7, 0], sizes = [1, 128], strides = [1, 1]} : vector<8x128xf32> to vector<1x128xf32>
    %253 = vector.broadcast %252 : vector<1x128xf32> to vector<8x128xf32>
    %254 = arith.mulf %253, %7 : vector<8x128xf32>
    %255 = arith.addf %251, %254 : vector<8x128xf32>
    %256 = vector.extract_strided_slice %8 {offsets = [7, 0], sizes = [1, 128], strides = [1, 1]} : vector<8x128xf32> to vector<1x128xf32>
    %257 = vector.broadcast %256 : vector<1x128xf32> to vector<8x128xf32>
    %258 = arith.mulf %257, %8 : vector<8x128xf32>
    %259 = arith.addf %255, %258 : vector<8x128xf32>
    %260 = vector.extract_strided_slice %9 {offsets = [7, 0], sizes = [1, 128], strides = [1, 1]} : vector<8x128xf32> to vector<1x128xf32>
    %261 = vector.broadcast %260 : vector<1x128xf32> to vector<8x128xf32>
    %262 = arith.mulf %261, %9 : vector<8x128xf32>
    %263 = arith.addf %259, %262 : vector<8x128xf32>
    %cst = arith.constant 0.000000e+00 : f32
    %264 = vector.broadcast %cst : f32 to vector<4x128xf32>
    %265 = vector.extract_strided_slice %10 {offsets = [0, 0], sizes = [1, 128], strides = [1, 1]} : vector<8x128xf32> to vector<1x128xf32>
    %266 = vector.extract_strided_slice %11 {offsets = [0, 0], sizes = [1, 128], strides = [1, 1]} : vector<8x128xf32> to vector<1x128xf32>
    %267 = vector.extract_strided_slice %12 {offsets = [0, 0], sizes = [1, 128], strides = [1, 1]} : vector<8x128xf32> to vector<1x128xf32>
    %268 = vector.extract_strided_slice %13 {offsets = [0, 0], sizes = [1, 128], strides = [1, 1]} : vector<8x128xf32> to vector<1x128xf32>
    %269 = vector.extract_strided_slice %14 {offsets = [0, 0], sizes = [1, 128], strides = [1, 1]} : vector<8x128xf32> to vector<1x128xf32>
    %cst_2 = arith.constant 0.000000e+00 : f32
    %270 = vector.broadcast %cst_2 : f32 to vector<1x128xf32>
    %271 = arith.subf %270, %269 : vector<1x128xf32>
    %272 = tpu.concatenate %46, %265, %266, %267, %268, %271 in 0 : vector<8x128xf32>, vector<1x128xf32>, vector<1x128xf32>, vector<1x128xf32>, vector<1x128xf32>, vector<1x128xf32> -> vector<13x128xf32>
    %273 = vector.extract_strided_slice %10 {offsets = [1, 0], sizes = [1, 128], strides = [1, 1]} : vector<8x128xf32> to vector<1x128xf32>
    %274 = vector.extract_strided_slice %11 {offsets = [1, 0], sizes = [1, 128], strides = [1, 1]} : vector<8x128xf32> to vector<1x128xf32>
    %275 = vector.extract_strided_slice %12 {offsets = [1, 0], sizes = [1, 128], strides = [1, 1]} : vector<8x128xf32> to vector<1x128xf32>
    %276 = vector.extract_strided_slice %13 {offsets = [1, 0], sizes = [1, 128], strides = [1, 1]} : vector<8x128xf32> to vector<1x128xf32>
    %277 = vector.extract_strided_slice %14 {offsets = [1, 0], sizes = [1, 128], strides = [1, 1]} : vector<8x128xf32> to vector<1x128xf32>
    %cst_3 = arith.constant 0.000000e+00 : f32
    %278 = vector.broadcast %cst_3 : f32 to vector<1x128xf32>
    %279 = arith.subf %278, %277 : vector<1x128xf32>
    %280 = tpu.concatenate %77, %273, %274, %275, %276, %279 in 0 : vector<8x128xf32>, vector<1x128xf32>, vector<1x128xf32>, vector<1x128xf32>, vector<1x128xf32>, vector<1x128xf32> -> vector<13x128xf32>
    %281 = vector.extract_strided_slice %10 {offsets = [2, 0], sizes = [1, 128], strides = [1, 1]} : vector<8x128xf32> to vector<1x128xf32>
    %282 = vector.extract_strided_slice %11 {offsets = [2, 0], sizes = [1, 128], strides = [1, 1]} : vector<8x128xf32> to vector<1x128xf32>
    %283 = vector.extract_strided_slice %12 {offsets = [2, 0], sizes = [1, 128], strides = [1, 1]} : vector<8x128xf32> to vector<1x128xf32>
    %284 = vector.extract_strided_slice %13 {offsets = [2, 0], sizes = [1, 128], strides = [1, 1]} : vector<8x128xf32> to vector<1x128xf32>
    %285 = vector.extract_strided_slice %14 {offsets = [2, 0], sizes = [1, 128], strides = [1, 1]} : vector<8x128xf32> to vector<1x128xf32>
    %cst_4 = arith.constant 0.000000e+00 : f32
    %286 = vector.broadcast %cst_4 : f32 to vector<1x128xf32>
    %287 = arith.subf %286, %285 : vector<1x128xf32>
    %288 = tpu.concatenate %108, %281, %282, %283, %284, %287 in 0 : vector<8x128xf32>, vector<1x128xf32>, vector<1x128xf32>, vector<1x128xf32>, vector<1x128xf32>, vector<1x128xf32> -> vector<13x128xf32>
    %289 = vector.extract_strided_slice %10 {offsets = [3, 0], sizes = [1, 128], strides = [1, 1]} : vector<8x128xf32> to vector<1x128xf32>
    %290 = vector.extract_strided_slice %11 {offsets = [3, 0], sizes = [1, 128], strides = [1, 1]} : vector<8x128xf32> to vector<1x128xf32>
    %291 = vector.extract_strided_slice %12 {offsets = [3, 0], sizes = [1, 128], strides = [1, 1]} : vector<8x128xf32> to vector<1x128xf32>
    %292 = vector.extract_strided_slice %13 {offsets = [3, 0], sizes = [1, 128], strides = [1, 1]} : vector<8x128xf32> to vector<1x128xf32>
    %293 = vector.extract_strided_slice %14 {offsets = [3, 0], sizes = [1, 128], strides = [1, 1]} : vector<8x128xf32> to vector<1x128xf32>
    %cst_5 = arith.constant 0.000000e+00 : f32
    %294 = vector.broadcast %cst_5 : f32 to vector<1x128xf32>
    %295 = arith.subf %294, %293 : vector<1x128xf32>
    %296 = tpu.concatenate %139, %289, %290, %291, %292, %295 in 0 : vector<8x128xf32>, vector<1x128xf32>, vector<1x128xf32>, vector<1x128xf32>, vector<1x128xf32>, vector<1x128xf32> -> vector<13x128xf32>
    %297 = vector.extract_strided_slice %10 {offsets = [4, 0], sizes = [1, 128], strides = [1, 1]} : vector<8x128xf32> to vector<1x128xf32>
    %298 = vector.extract_strided_slice %11 {offsets = [4, 0], sizes = [1, 128], strides = [1, 1]} : vector<8x128xf32> to vector<1x128xf32>
    %299 = vector.extract_strided_slice %12 {offsets = [4, 0], sizes = [1, 128], strides = [1, 1]} : vector<8x128xf32> to vector<1x128xf32>
    %300 = vector.extract_strided_slice %13 {offsets = [4, 0], sizes = [1, 128], strides = [1, 1]} : vector<8x128xf32> to vector<1x128xf32>
    %301 = vector.extract_strided_slice %14 {offsets = [4, 0], sizes = [1, 128], strides = [1, 1]} : vector<8x128xf32> to vector<1x128xf32>
    %cst_6 = arith.constant 0.000000e+00 : f32
    %302 = vector.broadcast %cst_6 : f32 to vector<1x128xf32>
    %303 = arith.subf %302, %301 : vector<1x128xf32>
    %304 = tpu.concatenate %170, %297, %298, %299, %300, %303 in 0 : vector<8x128xf32>, vector<1x128xf32>, vector<1x128xf32>, vector<1x128xf32>, vector<1x128xf32>, vector<1x128xf32> -> vector<13x128xf32>
    %305 = vector.extract_strided_slice %10 {offsets = [5, 0], sizes = [1, 128], strides = [1, 1]} : vector<8x128xf32> to vector<1x128xf32>
    %306 = vector.extract_strided_slice %11 {offsets = [5, 0], sizes = [1, 128], strides = [1, 1]} : vector<8x128xf32> to vector<1x128xf32>
    %307 = vector.extract_strided_slice %12 {offsets = [5, 0], sizes = [1, 128], strides = [1, 1]} : vector<8x128xf32> to vector<1x128xf32>
    %308 = vector.extract_strided_slice %13 {offsets = [5, 0], sizes = [1, 128], strides = [1, 1]} : vector<8x128xf32> to vector<1x128xf32>
    %309 = vector.extract_strided_slice %14 {offsets = [5, 0], sizes = [1, 128], strides = [1, 1]} : vector<8x128xf32> to vector<1x128xf32>
    %cst_7 = arith.constant 0.000000e+00 : f32
    %310 = vector.broadcast %cst_7 : f32 to vector<1x128xf32>
    %311 = arith.subf %310, %309 : vector<1x128xf32>
    %312 = tpu.concatenate %201, %305, %306, %307, %308, %311 in 0 : vector<8x128xf32>, vector<1x128xf32>, vector<1x128xf32>, vector<1x128xf32>, vector<1x128xf32>, vector<1x128xf32> -> vector<13x128xf32>
    %313 = vector.extract_strided_slice %10 {offsets = [6, 0], sizes = [1, 128], strides = [1, 1]} : vector<8x128xf32> to vector<1x128xf32>
    %314 = vector.extract_strided_slice %11 {offsets = [6, 0], sizes = [1, 128], strides = [1, 1]} : vector<8x128xf32> to vector<1x128xf32>
    %315 = vector.extract_strided_slice %12 {offsets = [6, 0], sizes = [1, 128], strides = [1, 1]} : vector<8x128xf32> to vector<1x128xf32>
    %316 = vector.extract_strided_slice %13 {offsets = [6, 0], sizes = [1, 128], strides = [1, 1]} : vector<8x128xf32> to vector<1x128xf32>
    %317 = vector.extract_strided_slice %14 {offsets = [6, 0], sizes = [1, 128], strides = [1, 1]} : vector<8x128xf32> to vector<1x128xf32>
    %cst_8 = arith.constant 0.000000e+00 : f32
    %318 = vector.broadcast %cst_8 : f32 to vector<1x128xf32>
    %319 = arith.subf %318, %317 : vector<1x128xf32>
    %320 = tpu.concatenate %232, %313, %314, %315, %316, %319 in 0 : vector<8x128xf32>, vector<1x128xf32>, vector<1x128xf32>, vector<1x128xf32>, vector<1x128xf32>, vector<1x128xf32> -> vector<13x128xf32>
    %321 = vector.extract_strided_slice %10 {offsets = [7, 0], sizes = [1, 128], strides = [1, 1]} : vector<8x128xf32> to vector<1x128xf32>
    %322 = vector.extract_strided_slice %11 {offsets = [7, 0], sizes = [1, 128], strides = [1, 1]} : vector<8x128xf32> to vector<1x128xf32>
    %323 = vector.extract_strided_slice %12 {offsets = [7, 0], sizes = [1, 128], strides = [1, 1]} : vector<8x128xf32> to vector<1x128xf32>
    %324 = vector.extract_strided_slice %13 {offsets = [7, 0], sizes = [1, 128], strides = [1, 1]} : vector<8x128xf32> to vector<1x128xf32>
    %325 = vector.extract_strided_slice %14 {offsets = [7, 0], sizes = [1, 128], strides = [1, 1]} : vector<8x128xf32> to vector<1x128xf32>
    %cst_9 = arith.constant 0.000000e+00 : f32
    %326 = vector.broadcast %cst_9 : f32 to vector<1x128xf32>
    %327 = arith.subf %326, %325 : vector<1x128xf32>
    %328 = tpu.concatenate %263, %321, %322, %323, %324, %327 in 0 : vector<8x128xf32>, vector<1x128xf32>, vector<1x128xf32>, vector<1x128xf32>, vector<1x128xf32>, vector<1x128xf32> -> vector<13x128xf32>
    %329 = vector.extract_strided_slice %15 {offsets = [0, 0], sizes = [1, 128], strides = [1, 1]} : vector<4x128xf32> to vector<1x128xf32>
    %330 = tpu.concatenate %10, %264, %329 in 0 : vector<8x128xf32>, vector<4x128xf32>, vector<1x128xf32> -> vector<13x128xf32>
    %331 = vector.extract_strided_slice %15 {offsets = [1, 0], sizes = [1, 128], strides = [1, 1]} : vector<4x128xf32> to vector<1x128xf32>
    %332 = tpu.concatenate %11, %264, %331 in 0 : vector<8x128xf32>, vector<4x128xf32>, vector<1x128xf32> -> vector<13x128xf32>
    %333 = vector.extract_strided_slice %15 {offsets = [2, 0], sizes = [1, 128], strides = [1, 1]} : vector<4x128xf32> to vector<1x128xf32>
    %334 = tpu.concatenate %12, %264, %333 in 0 : vector<8x128xf32>, vector<4x128xf32>, vector<1x128xf32> -> vector<13x128xf32>
    %335 = vector.extract_strided_slice %15 {offsets = [3, 0], sizes = [1, 128], strides = [1, 1]} : vector<4x128xf32> to vector<1x128xf32>
    %336 = tpu.concatenate %13, %264, %335 in 0 : vector<8x128xf32>, vector<4x128xf32>, vector<1x128xf32> -> vector<13x128xf32>
    %337 = vector.extract_strided_slice %272 {offsets = [0, 0], sizes = [1, 128], strides = [1, 1]} : vector<13x128xf32> to vector<1x128xf32>
    %338 = tpu.reciprocal %337 : vector<1x128xf32> -> vector<1x128xf32>
    %339 = vector.broadcast %338 : vector<1x128xf32> to vector<13x128xf32>
    %340 = arith.mulf %272, %339 : vector<13x128xf32>
    %341 = vector.extract_strided_slice %280 {offsets = [0, 0], sizes = [1, 128], strides = [1, 1]} : vector<13x128xf32> to vector<1x128xf32>
    %342 = vector.broadcast %341 : vector<1x128xf32> to vector<13x128xf32>
    %343 = arith.mulf %342, %340 : vector<13x128xf32>
    %344 = arith.subf %280, %343 : vector<13x128xf32>
    %345 = vector.extract_strided_slice %288 {offsets = [0, 0], sizes = [1, 128], strides = [1, 1]} : vector<13x128xf32> to vector<1x128xf32>
    %346 = vector.broadcast %345 : vector<1x128xf32> to vector<13x128xf32>
    %347 = arith.mulf %346, %340 : vector<13x128xf32>
    %348 = arith.subf %288, %347 : vector<13x128xf32>
    %349 = vector.extract_strided_slice %296 {offsets = [0, 0], sizes = [1, 128], strides = [1, 1]} : vector<13x128xf32> to vector<1x128xf32>
    %350 = vector.broadcast %349 : vector<1x128xf32> to vector<13x128xf32>
    %351 = arith.mulf %350, %340 : vector<13x128xf32>
    %352 = arith.subf %296, %351 : vector<13x128xf32>
    %353 = vector.extract_strided_slice %304 {offsets = [0, 0], sizes = [1, 128], strides = [1, 1]} : vector<13x128xf32> to vector<1x128xf32>
    %354 = vector.broadcast %353 : vector<1x128xf32> to vector<13x128xf32>
    %355 = arith.mulf %354, %340 : vector<13x128xf32>
    %356 = arith.subf %304, %355 : vector<13x128xf32>
    %357 = vector.extract_strided_slice %312 {offsets = [0, 0], sizes = [1, 128], strides = [1, 1]} : vector<13x128xf32> to vector<1x128xf32>
    %358 = vector.broadcast %357 : vector<1x128xf32> to vector<13x128xf32>
    %359 = arith.mulf %358, %340 : vector<13x128xf32>
    %360 = arith.subf %312, %359 : vector<13x128xf32>
    %361 = vector.extract_strided_slice %320 {offsets = [0, 0], sizes = [1, 128], strides = [1, 1]} : vector<13x128xf32> to vector<1x128xf32>
    %362 = vector.broadcast %361 : vector<1x128xf32> to vector<13x128xf32>
    %363 = arith.mulf %362, %340 : vector<13x128xf32>
    %364 = arith.subf %320, %363 : vector<13x128xf32>
    %365 = vector.extract_strided_slice %328 {offsets = [0, 0], sizes = [1, 128], strides = [1, 1]} : vector<13x128xf32> to vector<1x128xf32>
    %366 = vector.broadcast %365 : vector<1x128xf32> to vector<13x128xf32>
    %367 = arith.mulf %366, %340 : vector<13x128xf32>
    %368 = arith.subf %328, %367 : vector<13x128xf32>
    %369 = vector.extract_strided_slice %330 {offsets = [0, 0], sizes = [1, 128], strides = [1, 1]} : vector<13x128xf32> to vector<1x128xf32>
    %370 = vector.broadcast %369 : vector<1x128xf32> to vector<13x128xf32>
    %371 = arith.mulf %370, %340 : vector<13x128xf32>
    %372 = arith.subf %330, %371 : vector<13x128xf32>
    %373 = vector.extract_strided_slice %332 {offsets = [0, 0], sizes = [1, 128], strides = [1, 1]} : vector<13x128xf32> to vector<1x128xf32>
    %374 = vector.broadcast %373 : vector<1x128xf32> to vector<13x128xf32>
    %375 = arith.mulf %374, %340 : vector<13x128xf32>
    %376 = arith.subf %332, %375 : vector<13x128xf32>
    %377 = vector.extract_strided_slice %334 {offsets = [0, 0], sizes = [1, 128], strides = [1, 1]} : vector<13x128xf32> to vector<1x128xf32>
    %378 = vector.broadcast %377 : vector<1x128xf32> to vector<13x128xf32>
    %379 = arith.mulf %378, %340 : vector<13x128xf32>
    %380 = arith.subf %334, %379 : vector<13x128xf32>
    %381 = vector.extract_strided_slice %336 {offsets = [0, 0], sizes = [1, 128], strides = [1, 1]} : vector<13x128xf32> to vector<1x128xf32>
    %382 = vector.broadcast %381 : vector<1x128xf32> to vector<13x128xf32>
    %383 = arith.mulf %382, %340 : vector<13x128xf32>
    %384 = arith.subf %336, %383 : vector<13x128xf32>
    %385 = vector.extract_strided_slice %344 {offsets = [1, 0], sizes = [1, 128], strides = [1, 1]} : vector<13x128xf32> to vector<1x128xf32>
    %386 = tpu.reciprocal %385 : vector<1x128xf32> -> vector<1x128xf32>
    %387 = vector.broadcast %386 : vector<1x128xf32> to vector<13x128xf32>
    %388 = arith.mulf %344, %387 : vector<13x128xf32>
    %389 = vector.extract_strided_slice %340 {offsets = [1, 0], sizes = [1, 128], strides = [1, 1]} : vector<13x128xf32> to vector<1x128xf32>
    %390 = vector.broadcast %389 : vector<1x128xf32> to vector<13x128xf32>
    %391 = arith.mulf %390, %388 : vector<13x128xf32>
    %392 = arith.subf %340, %391 : vector<13x128xf32>
    %393 = vector.extract_strided_slice %348 {offsets = [1, 0], sizes = [1, 128], strides = [1, 1]} : vector<13x128xf32> to vector<1x128xf32>
    %394 = vector.broadcast %393 : vector<1x128xf32> to vector<13x128xf32>
    %395 = arith.mulf %394, %388 : vector<13x128xf32>
    %396 = arith.subf %348, %395 : vector<13x128xf32>
    %397 = vector.extract_strided_slice %352 {offsets = [1, 0], sizes = [1, 128], strides = [1, 1]} : vector<13x128xf32> to vector<1x128xf32>
    %398 = vector.broadcast %397 : vector<1x128xf32> to vector<13x128xf32>
    %399 = arith.mulf %398, %388 : vector<13x128xf32>
    %400 = arith.subf %352, %399 : vector<13x128xf32>
    %401 = vector.extract_strided_slice %356 {offsets = [1, 0], sizes = [1, 128], strides = [1, 1]} : vector<13x128xf32> to vector<1x128xf32>
    %402 = vector.broadcast %401 : vector<1x128xf32> to vector<13x128xf32>
    %403 = arith.mulf %402, %388 : vector<13x128xf32>
    %404 = arith.subf %356, %403 : vector<13x128xf32>
    %405 = vector.extract_strided_slice %360 {offsets = [1, 0], sizes = [1, 128], strides = [1, 1]} : vector<13x128xf32> to vector<1x128xf32>
    %406 = vector.broadcast %405 : vector<1x128xf32> to vector<13x128xf32>
    %407 = arith.mulf %406, %388 : vector<13x128xf32>
    %408 = arith.subf %360, %407 : vector<13x128xf32>
    %409 = vector.extract_strided_slice %364 {offsets = [1, 0], sizes = [1, 128], strides = [1, 1]} : vector<13x128xf32> to vector<1x128xf32>
    %410 = vector.broadcast %409 : vector<1x128xf32> to vector<13x128xf32>
    %411 = arith.mulf %410, %388 : vector<13x128xf32>
    %412 = arith.subf %364, %411 : vector<13x128xf32>
    %413 = vector.extract_strided_slice %368 {offsets = [1, 0], sizes = [1, 128], strides = [1, 1]} : vector<13x128xf32> to vector<1x128xf32>
    %414 = vector.broadcast %413 : vector<1x128xf32> to vector<13x128xf32>
    %415 = arith.mulf %414, %388 : vector<13x128xf32>
    %416 = arith.subf %368, %415 : vector<13x128xf32>
    %417 = vector.extract_strided_slice %372 {offsets = [1, 0], sizes = [1, 128], strides = [1, 1]} : vector<13x128xf32> to vector<1x128xf32>
    %418 = vector.broadcast %417 : vector<1x128xf32> to vector<13x128xf32>
    %419 = arith.mulf %418, %388 : vector<13x128xf32>
    %420 = arith.subf %372, %419 : vector<13x128xf32>
    %421 = vector.extract_strided_slice %376 {offsets = [1, 0], sizes = [1, 128], strides = [1, 1]} : vector<13x128xf32> to vector<1x128xf32>
    %422 = vector.broadcast %421 : vector<1x128xf32> to vector<13x128xf32>
    %423 = arith.mulf %422, %388 : vector<13x128xf32>
    %424 = arith.subf %376, %423 : vector<13x128xf32>
    %425 = vector.extract_strided_slice %380 {offsets = [1, 0], sizes = [1, 128], strides = [1, 1]} : vector<13x128xf32> to vector<1x128xf32>
    %426 = vector.broadcast %425 : vector<1x128xf32> to vector<13x128xf32>
    %427 = arith.mulf %426, %388 : vector<13x128xf32>
    %428 = arith.subf %380, %427 : vector<13x128xf32>
    %429 = vector.extract_strided_slice %384 {offsets = [1, 0], sizes = [1, 128], strides = [1, 1]} : vector<13x128xf32> to vector<1x128xf32>
    %430 = vector.broadcast %429 : vector<1x128xf32> to vector<13x128xf32>
    %431 = arith.mulf %430, %388 : vector<13x128xf32>
    %432 = arith.subf %384, %431 : vector<13x128xf32>
    %433 = vector.extract_strided_slice %396 {offsets = [2, 0], sizes = [1, 128], strides = [1, 1]} : vector<13x128xf32> to vector<1x128xf32>
    %434 = tpu.reciprocal %433 : vector<1x128xf32> -> vector<1x128xf32>
    %435 = vector.broadcast %434 : vector<1x128xf32> to vector<13x128xf32>
    %436 = arith.mulf %396, %435 : vector<13x128xf32>
    %437 = vector.extract_strided_slice %392 {offsets = [2, 0], sizes = [1, 128], strides = [1, 1]} : vector<13x128xf32> to vector<1x128xf32>
    %438 = vector.broadcast %437 : vector<1x128xf32> to vector<13x128xf32>
    %439 = arith.mulf %438, %436 : vector<13x128xf32>
    %440 = arith.subf %392, %439 : vector<13x128xf32>
    %441 = vector.extract_strided_slice %388 {offsets = [2, 0], sizes = [1, 128], strides = [1, 1]} : vector<13x128xf32> to vector<1x128xf32>
    %442 = vector.broadcast %441 : vector<1x128xf32> to vector<13x128xf32>
    %443 = arith.mulf %442, %436 : vector<13x128xf32>
    %444 = arith.subf %388, %443 : vector<13x128xf32>
    %445 = vector.extract_strided_slice %400 {offsets = [2, 0], sizes = [1, 128], strides = [1, 1]} : vector<13x128xf32> to vector<1x128xf32>
    %446 = vector.broadcast %445 : vector<1x128xf32> to vector<13x128xf32>
    %447 = arith.mulf %446, %436 : vector<13x128xf32>
    %448 = arith.subf %400, %447 : vector<13x128xf32>
    %449 = vector.extract_strided_slice %404 {offsets = [2, 0], sizes = [1, 128], strides = [1, 1]} : vector<13x128xf32> to vector<1x128xf32>
    %450 = vector.broadcast %449 : vector<1x128xf32> to vector<13x128xf32>
    %451 = arith.mulf %450, %436 : vector<13x128xf32>
    %452 = arith.subf %404, %451 : vector<13x128xf32>
    %453 = vector.extract_strided_slice %408 {offsets = [2, 0], sizes = [1, 128], strides = [1, 1]} : vector<13x128xf32> to vector<1x128xf32>
    %454 = vector.broadcast %453 : vector<1x128xf32> to vector<13x128xf32>
    %455 = arith.mulf %454, %436 : vector<13x128xf32>
    %456 = arith.subf %408, %455 : vector<13x128xf32>
    %457 = vector.extract_strided_slice %412 {offsets = [2, 0], sizes = [1, 128], strides = [1, 1]} : vector<13x128xf32> to vector<1x128xf32>
    %458 = vector.broadcast %457 : vector<1x128xf32> to vector<13x128xf32>
    %459 = arith.mulf %458, %436 : vector<13x128xf32>
    %460 = arith.subf %412, %459 : vector<13x128xf32>
    %461 = vector.extract_strided_slice %416 {offsets = [2, 0], sizes = [1, 128], strides = [1, 1]} : vector<13x128xf32> to vector<1x128xf32>
    %462 = vector.broadcast %461 : vector<1x128xf32> to vector<13x128xf32>
    %463 = arith.mulf %462, %436 : vector<13x128xf32>
    %464 = arith.subf %416, %463 : vector<13x128xf32>
    %465 = vector.extract_strided_slice %420 {offsets = [2, 0], sizes = [1, 128], strides = [1, 1]} : vector<13x128xf32> to vector<1x128xf32>
    %466 = vector.broadcast %465 : vector<1x128xf32> to vector<13x128xf32>
    %467 = arith.mulf %466, %436 : vector<13x128xf32>
    %468 = arith.subf %420, %467 : vector<13x128xf32>
    %469 = vector.extract_strided_slice %424 {offsets = [2, 0], sizes = [1, 128], strides = [1, 1]} : vector<13x128xf32> to vector<1x128xf32>
    %470 = vector.broadcast %469 : vector<1x128xf32> to vector<13x128xf32>
    %471 = arith.mulf %470, %436 : vector<13x128xf32>
    %472 = arith.subf %424, %471 : vector<13x128xf32>
    %473 = vector.extract_strided_slice %428 {offsets = [2, 0], sizes = [1, 128], strides = [1, 1]} : vector<13x128xf32> to vector<1x128xf32>
    %474 = vector.broadcast %473 : vector<1x128xf32> to vector<13x128xf32>
    %475 = arith.mulf %474, %436 : vector<13x128xf32>
    %476 = arith.subf %428, %475 : vector<13x128xf32>
    %477 = vector.extract_strided_slice %432 {offsets = [2, 0], sizes = [1, 128], strides = [1, 1]} : vector<13x128xf32> to vector<1x128xf32>
    %478 = vector.broadcast %477 : vector<1x128xf32> to vector<13x128xf32>
    %479 = arith.mulf %478, %436 : vector<13x128xf32>
    %480 = arith.subf %432, %479 : vector<13x128xf32>
    %481 = vector.extract_strided_slice %448 {offsets = [3, 0], sizes = [1, 128], strides = [1, 1]} : vector<13x128xf32> to vector<1x128xf32>
    %482 = tpu.reciprocal %481 : vector<1x128xf32> -> vector<1x128xf32>
    %483 = vector.broadcast %482 : vector<1x128xf32> to vector<13x128xf32>
    %484 = arith.mulf %448, %483 : vector<13x128xf32>
    %485 = vector.extract_strided_slice %440 {offsets = [3, 0], sizes = [1, 128], strides = [1, 1]} : vector<13x128xf32> to vector<1x128xf32>
    %486 = vector.broadcast %485 : vector<1x128xf32> to vector<13x128xf32>
    %487 = arith.mulf %486, %484 : vector<13x128xf32>
    %488 = arith.subf %440, %487 : vector<13x128xf32>
    %489 = vector.extract_strided_slice %444 {offsets = [3, 0], sizes = [1, 128], strides = [1, 1]} : vector<13x128xf32> to vector<1x128xf32>
    %490 = vector.broadcast %489 : vector<1x128xf32> to vector<13x128xf32>
    %491 = arith.mulf %490, %484 : vector<13x128xf32>
    %492 = arith.subf %444, %491 : vector<13x128xf32>
    %493 = vector.extract_strided_slice %436 {offsets = [3, 0], sizes = [1, 128], strides = [1, 1]} : vector<13x128xf32> to vector<1x128xf32>
    %494 = vector.broadcast %493 : vector<1x128xf32> to vector<13x128xf32>
    %495 = arith.mulf %494, %484 : vector<13x128xf32>
    %496 = arith.subf %436, %495 : vector<13x128xf32>
    %497 = vector.extract_strided_slice %452 {offsets = [3, 0], sizes = [1, 128], strides = [1, 1]} : vector<13x128xf32> to vector<1x128xf32>
    %498 = vector.broadcast %497 : vector<1x128xf32> to vector<13x128xf32>
    %499 = arith.mulf %498, %484 : vector<13x128xf32>
    %500 = arith.subf %452, %499 : vector<13x128xf32>
    %501 = vector.extract_strided_slice %456 {offsets = [3, 0], sizes = [1, 128], strides = [1, 1]} : vector<13x128xf32> to vector<1x128xf32>
    %502 = vector.broadcast %501 : vector<1x128xf32> to vector<13x128xf32>
    %503 = arith.mulf %502, %484 : vector<13x128xf32>
    %504 = arith.subf %456, %503 : vector<13x128xf32>
    %505 = vector.extract_strided_slice %460 {offsets = [3, 0], sizes = [1, 128], strides = [1, 1]} : vector<13x128xf32> to vector<1x128xf32>
    %506 = vector.broadcast %505 : vector<1x128xf32> to vector<13x128xf32>
    %507 = arith.mulf %506, %484 : vector<13x128xf32>
    %508 = arith.subf %460, %507 : vector<13x128xf32>
    %509 = vector.extract_strided_slice %464 {offsets = [3, 0], sizes = [1, 128], strides = [1, 1]} : vector<13x128xf32> to vector<1x128xf32>
    %510 = vector.broadcast %509 : vector<1x128xf32> to vector<13x128xf32>
    %511 = arith.mulf %510, %484 : vector<13x128xf32>
    %512 = arith.subf %464, %511 : vector<13x128xf32>
    %513 = vector.extract_strided_slice %468 {offsets = [3, 0], sizes = [1, 128], strides = [1, 1]} : vector<13x128xf32> to vector<1x128xf32>
    %514 = vector.broadcast %513 : vector<1x128xf32> to vector<13x128xf32>
    %515 = arith.mulf %514, %484 : vector<13x128xf32>
    %516 = arith.subf %468, %515 : vector<13x128xf32>
    %517 = vector.extract_strided_slice %472 {offsets = [3, 0], sizes = [1, 128], strides = [1, 1]} : vector<13x128xf32> to vector<1x128xf32>
    %518 = vector.broadcast %517 : vector<1x128xf32> to vector<13x128xf32>
    %519 = arith.mulf %518, %484 : vector<13x128xf32>
    %520 = arith.subf %472, %519 : vector<13x128xf32>
    %521 = vector.extract_strided_slice %476 {offsets = [3, 0], sizes = [1, 128], strides = [1, 1]} : vector<13x128xf32> to vector<1x128xf32>
    %522 = vector.broadcast %521 : vector<1x128xf32> to vector<13x128xf32>
    %523 = arith.mulf %522, %484 : vector<13x128xf32>
    %524 = arith.subf %476, %523 : vector<13x128xf32>
    %525 = vector.extract_strided_slice %480 {offsets = [3, 0], sizes = [1, 128], strides = [1, 1]} : vector<13x128xf32> to vector<1x128xf32>
    %526 = vector.broadcast %525 : vector<1x128xf32> to vector<13x128xf32>
    %527 = arith.mulf %526, %484 : vector<13x128xf32>
    %528 = arith.subf %480, %527 : vector<13x128xf32>
    %529 = vector.extract_strided_slice %500 {offsets = [4, 0], sizes = [1, 128], strides = [1, 1]} : vector<13x128xf32> to vector<1x128xf32>
    %530 = tpu.reciprocal %529 : vector<1x128xf32> -> vector<1x128xf32>
    %531 = vector.broadcast %530 : vector<1x128xf32> to vector<13x128xf32>
    %532 = arith.mulf %500, %531 : vector<13x128xf32>
    %533 = vector.extract_strided_slice %488 {offsets = [4, 0], sizes = [1, 128], strides = [1, 1]} : vector<13x128xf32> to vector<1x128xf32>
    %534 = vector.broadcast %533 : vector<1x128xf32> to vector<13x128xf32>
    %535 = arith.mulf %534, %532 : vector<13x128xf32>
    %536 = arith.subf %488, %535 : vector<13x128xf32>
    %537 = vector.extract_strided_slice %492 {offsets = [4, 0], sizes = [1, 128], strides = [1, 1]} : vector<13x128xf32> to vector<1x128xf32>
    %538 = vector.broadcast %537 : vector<1x128xf32> to vector<13x128xf32>
    %539 = arith.mulf %538, %532 : vector<13x128xf32>
    %540 = arith.subf %492, %539 : vector<13x128xf32>
    %541 = vector.extract_strided_slice %496 {offsets = [4, 0], sizes = [1, 128], strides = [1, 1]} : vector<13x128xf32> to vector<1x128xf32>
    %542 = vector.broadcast %541 : vector<1x128xf32> to vector<13x128xf32>
    %543 = arith.mulf %542, %532 : vector<13x128xf32>
    %544 = arith.subf %496, %543 : vector<13x128xf32>
    %545 = vector.extract_strided_slice %484 {offsets = [4, 0], sizes = [1, 128], strides = [1, 1]} : vector<13x128xf32> to vector<1x128xf32>
    %546 = vector.broadcast %545 : vector<1x128xf32> to vector<13x128xf32>
    %547 = arith.mulf %546, %532 : vector<13x128xf32>
    %548 = arith.subf %484, %547 : vector<13x128xf32>
    %549 = vector.extract_strided_slice %504 {offsets = [4, 0], sizes = [1, 128], strides = [1, 1]} : vector<13x128xf32> to vector<1x128xf32>
    %550 = vector.broadcast %549 : vector<1x128xf32> to vector<13x128xf32>
    %551 = arith.mulf %550, %532 : vector<13x128xf32>
    %552 = arith.subf %504, %551 : vector<13x128xf32>
    %553 = vector.extract_strided_slice %508 {offsets = [4, 0], sizes = [1, 128], strides = [1, 1]} : vector<13x128xf32> to vector<1x128xf32>
    %554 = vector.broadcast %553 : vector<1x128xf32> to vector<13x128xf32>
    %555 = arith.mulf %554, %532 : vector<13x128xf32>
    %556 = arith.subf %508, %555 : vector<13x128xf32>
    %557 = vector.extract_strided_slice %512 {offsets = [4, 0], sizes = [1, 128], strides = [1, 1]} : vector<13x128xf32> to vector<1x128xf32>
    %558 = vector.broadcast %557 : vector<1x128xf32> to vector<13x128xf32>
    %559 = arith.mulf %558, %532 : vector<13x128xf32>
    %560 = arith.subf %512, %559 : vector<13x128xf32>
    %561 = vector.extract_strided_slice %516 {offsets = [4, 0], sizes = [1, 128], strides = [1, 1]} : vector<13x128xf32> to vector<1x128xf32>
    %562 = vector.broadcast %561 : vector<1x128xf32> to vector<13x128xf32>
    %563 = arith.mulf %562, %532 : vector<13x128xf32>
    %564 = arith.subf %516, %563 : vector<13x128xf32>
    %565 = vector.extract_strided_slice %520 {offsets = [4, 0], sizes = [1, 128], strides = [1, 1]} : vector<13x128xf32> to vector<1x128xf32>
    %566 = vector.broadcast %565 : vector<1x128xf32> to vector<13x128xf32>
    %567 = arith.mulf %566, %532 : vector<13x128xf32>
    %568 = arith.subf %520, %567 : vector<13x128xf32>
    %569 = vector.extract_strided_slice %524 {offsets = [4, 0], sizes = [1, 128], strides = [1, 1]} : vector<13x128xf32> to vector<1x128xf32>
    %570 = vector.broadcast %569 : vector<1x128xf32> to vector<13x128xf32>
    %571 = arith.mulf %570, %532 : vector<13x128xf32>
    %572 = arith.subf %524, %571 : vector<13x128xf32>
    %573 = vector.extract_strided_slice %528 {offsets = [4, 0], sizes = [1, 128], strides = [1, 1]} : vector<13x128xf32> to vector<1x128xf32>
    %574 = vector.broadcast %573 : vector<1x128xf32> to vector<13x128xf32>
    %575 = arith.mulf %574, %532 : vector<13x128xf32>
    %576 = arith.subf %528, %575 : vector<13x128xf32>
    %577 = vector.extract_strided_slice %552 {offsets = [5, 0], sizes = [1, 128], strides = [1, 1]} : vector<13x128xf32> to vector<1x128xf32>
    %578 = tpu.reciprocal %577 : vector<1x128xf32> -> vector<1x128xf32>
    %579 = vector.broadcast %578 : vector<1x128xf32> to vector<13x128xf32>
    %580 = arith.mulf %552, %579 : vector<13x128xf32>
    %581 = vector.extract_strided_slice %536 {offsets = [5, 0], sizes = [1, 128], strides = [1, 1]} : vector<13x128xf32> to vector<1x128xf32>
    %582 = vector.broadcast %581 : vector<1x128xf32> to vector<13x128xf32>
    %583 = arith.mulf %582, %580 : vector<13x128xf32>
    %584 = arith.subf %536, %583 : vector<13x128xf32>
    %585 = vector.extract_strided_slice %540 {offsets = [5, 0], sizes = [1, 128], strides = [1, 1]} : vector<13x128xf32> to vector<1x128xf32>
    %586 = vector.broadcast %585 : vector<1x128xf32> to vector<13x128xf32>
    %587 = arith.mulf %586, %580 : vector<13x128xf32>
    %588 = arith.subf %540, %587 : vector<13x128xf32>
    %589 = vector.extract_strided_slice %544 {offsets = [5, 0], sizes = [1, 128], strides = [1, 1]} : vector<13x128xf32> to vector<1x128xf32>
    %590 = vector.broadcast %589 : vector<1x128xf32> to vector<13x128xf32>
    %591 = arith.mulf %590, %580 : vector<13x128xf32>
    %592 = arith.subf %544, %591 : vector<13x128xf32>
    %593 = vector.extract_strided_slice %548 {offsets = [5, 0], sizes = [1, 128], strides = [1, 1]} : vector<13x128xf32> to vector<1x128xf32>
    %594 = vector.broadcast %593 : vector<1x128xf32> to vector<13x128xf32>
    %595 = arith.mulf %594, %580 : vector<13x128xf32>
    %596 = arith.subf %548, %595 : vector<13x128xf32>
    %597 = vector.extract_strided_slice %532 {offsets = [5, 0], sizes = [1, 128], strides = [1, 1]} : vector<13x128xf32> to vector<1x128xf32>
    %598 = vector.broadcast %597 : vector<1x128xf32> to vector<13x128xf32>
    %599 = arith.mulf %598, %580 : vector<13x128xf32>
    %600 = arith.subf %532, %599 : vector<13x128xf32>
    %601 = vector.extract_strided_slice %556 {offsets = [5, 0], sizes = [1, 128], strides = [1, 1]} : vector<13x128xf32> to vector<1x128xf32>
    %602 = vector.broadcast %601 : vector<1x128xf32> to vector<13x128xf32>
    %603 = arith.mulf %602, %580 : vector<13x128xf32>
    %604 = arith.subf %556, %603 : vector<13x128xf32>
    %605 = vector.extract_strided_slice %560 {offsets = [5, 0], sizes = [1, 128], strides = [1, 1]} : vector<13x128xf32> to vector<1x128xf32>
    %606 = vector.broadcast %605 : vector<1x128xf32> to vector<13x128xf32>
    %607 = arith.mulf %606, %580 : vector<13x128xf32>
    %608 = arith.subf %560, %607 : vector<13x128xf32>
    %609 = vector.extract_strided_slice %564 {offsets = [5, 0], sizes = [1, 128], strides = [1, 1]} : vector<13x128xf32> to vector<1x128xf32>
    %610 = vector.broadcast %609 : vector<1x128xf32> to vector<13x128xf32>
    %611 = arith.mulf %610, %580 : vector<13x128xf32>
    %612 = arith.subf %564, %611 : vector<13x128xf32>
    %613 = vector.extract_strided_slice %568 {offsets = [5, 0], sizes = [1, 128], strides = [1, 1]} : vector<13x128xf32> to vector<1x128xf32>
    %614 = vector.broadcast %613 : vector<1x128xf32> to vector<13x128xf32>
    %615 = arith.mulf %614, %580 : vector<13x128xf32>
    %616 = arith.subf %568, %615 : vector<13x128xf32>
    %617 = vector.extract_strided_slice %572 {offsets = [5, 0], sizes = [1, 128], strides = [1, 1]} : vector<13x128xf32> to vector<1x128xf32>
    %618 = vector.broadcast %617 : vector<1x128xf32> to vector<13x128xf32>
    %619 = arith.mulf %618, %580 : vector<13x128xf32>
    %620 = arith.subf %572, %619 : vector<13x128xf32>
    %621 = vector.extract_strided_slice %576 {offsets = [5, 0], sizes = [1, 128], strides = [1, 1]} : vector<13x128xf32> to vector<1x128xf32>
    %622 = vector.broadcast %621 : vector<1x128xf32> to vector<13x128xf32>
    %623 = arith.mulf %622, %580 : vector<13x128xf32>
    %624 = arith.subf %576, %623 : vector<13x128xf32>
    %625 = vector.extract_strided_slice %604 {offsets = [6, 0], sizes = [1, 128], strides = [1, 1]} : vector<13x128xf32> to vector<1x128xf32>
    %626 = tpu.reciprocal %625 : vector<1x128xf32> -> vector<1x128xf32>
    %627 = vector.broadcast %626 : vector<1x128xf32> to vector<13x128xf32>
    %628 = arith.mulf %604, %627 : vector<13x128xf32>
    %629 = vector.extract_strided_slice %584 {offsets = [6, 0], sizes = [1, 128], strides = [1, 1]} : vector<13x128xf32> to vector<1x128xf32>
    %630 = vector.broadcast %629 : vector<1x128xf32> to vector<13x128xf32>
    %631 = arith.mulf %630, %628 : vector<13x128xf32>
    %632 = arith.subf %584, %631 : vector<13x128xf32>
    %633 = vector.extract_strided_slice %588 {offsets = [6, 0], sizes = [1, 128], strides = [1, 1]} : vector<13x128xf32> to vector<1x128xf32>
    %634 = vector.broadcast %633 : vector<1x128xf32> to vector<13x128xf32>
    %635 = arith.mulf %634, %628 : vector<13x128xf32>
    %636 = arith.subf %588, %635 : vector<13x128xf32>
    %637 = vector.extract_strided_slice %592 {offsets = [6, 0], sizes = [1, 128], strides = [1, 1]} : vector<13x128xf32> to vector<1x128xf32>
    %638 = vector.broadcast %637 : vector<1x128xf32> to vector<13x128xf32>
    %639 = arith.mulf %638, %628 : vector<13x128xf32>
    %640 = arith.subf %592, %639 : vector<13x128xf32>
    %641 = vector.extract_strided_slice %596 {offsets = [6, 0], sizes = [1, 128], strides = [1, 1]} : vector<13x128xf32> to vector<1x128xf32>
    %642 = vector.broadcast %641 : vector<1x128xf32> to vector<13x128xf32>
    %643 = arith.mulf %642, %628 : vector<13x128xf32>
    %644 = arith.subf %596, %643 : vector<13x128xf32>
    %645 = vector.extract_strided_slice %600 {offsets = [6, 0], sizes = [1, 128], strides = [1, 1]} : vector<13x128xf32> to vector<1x128xf32>
    %646 = vector.broadcast %645 : vector<1x128xf32> to vector<13x128xf32>
    %647 = arith.mulf %646, %628 : vector<13x128xf32>
    %648 = arith.subf %600, %647 : vector<13x128xf32>
    %649 = vector.extract_strided_slice %580 {offsets = [6, 0], sizes = [1, 128], strides = [1, 1]} : vector<13x128xf32> to vector<1x128xf32>
    %650 = vector.broadcast %649 : vector<1x128xf32> to vector<13x128xf32>
    %651 = arith.mulf %650, %628 : vector<13x128xf32>
    %652 = arith.subf %580, %651 : vector<13x128xf32>
    %653 = vector.extract_strided_slice %608 {offsets = [6, 0], sizes = [1, 128], strides = [1, 1]} : vector<13x128xf32> to vector<1x128xf32>
    %654 = vector.broadcast %653 : vector<1x128xf32> to vector<13x128xf32>
    %655 = arith.mulf %654, %628 : vector<13x128xf32>
    %656 = arith.subf %608, %655 : vector<13x128xf32>
    %657 = vector.extract_strided_slice %612 {offsets = [6, 0], sizes = [1, 128], strides = [1, 1]} : vector<13x128xf32> to vector<1x128xf32>
    %658 = vector.broadcast %657 : vector<1x128xf32> to vector<13x128xf32>
    %659 = arith.mulf %658, %628 : vector<13x128xf32>
    %660 = arith.subf %612, %659 : vector<13x128xf32>
    %661 = vector.extract_strided_slice %616 {offsets = [6, 0], sizes = [1, 128], strides = [1, 1]} : vector<13x128xf32> to vector<1x128xf32>
    %662 = vector.broadcast %661 : vector<1x128xf32> to vector<13x128xf32>
    %663 = arith.mulf %662, %628 : vector<13x128xf32>
    %664 = arith.subf %616, %663 : vector<13x128xf32>
    %665 = vector.extract_strided_slice %620 {offsets = [6, 0], sizes = [1, 128], strides = [1, 1]} : vector<13x128xf32> to vector<1x128xf32>
    %666 = vector.broadcast %665 : vector<1x128xf32> to vector<13x128xf32>
    %667 = arith.mulf %666, %628 : vector<13x128xf32>
    %668 = arith.subf %620, %667 : vector<13x128xf32>
    %669 = vector.extract_strided_slice %624 {offsets = [6, 0], sizes = [1, 128], strides = [1, 1]} : vector<13x128xf32> to vector<1x128xf32>
    %670 = vector.broadcast %669 : vector<1x128xf32> to vector<13x128xf32>
    %671 = arith.mulf %670, %628 : vector<13x128xf32>
    %672 = arith.subf %624, %671 : vector<13x128xf32>
    %673 = vector.extract_strided_slice %656 {offsets = [7, 0], sizes = [1, 128], strides = [1, 1]} : vector<13x128xf32> to vector<1x128xf32>
    %674 = tpu.reciprocal %673 : vector<1x128xf32> -> vector<1x128xf32>
    %675 = vector.broadcast %674 : vector<1x128xf32> to vector<13x128xf32>
    %676 = arith.mulf %656, %675 : vector<13x128xf32>
    %677 = vector.extract_strided_slice %632 {offsets = [7, 0], sizes = [1, 128], strides = [1, 1]} : vector<13x128xf32> to vector<1x128xf32>
    %678 = vector.broadcast %677 : vector<1x128xf32> to vector<13x128xf32>
    %679 = arith.mulf %678, %676 : vector<13x128xf32>
    %680 = arith.subf %632, %679 : vector<13x128xf32>
    %681 = vector.extract_strided_slice %636 {offsets = [7, 0], sizes = [1, 128], strides = [1, 1]} : vector<13x128xf32> to vector<1x128xf32>
    %682 = vector.broadcast %681 : vector<1x128xf32> to vector<13x128xf32>
    %683 = arith.mulf %682, %676 : vector<13x128xf32>
    %684 = arith.subf %636, %683 : vector<13x128xf32>
    %685 = vector.extract_strided_slice %640 {offsets = [7, 0], sizes = [1, 128], strides = [1, 1]} : vector<13x128xf32> to vector<1x128xf32>
    %686 = vector.broadcast %685 : vector<1x128xf32> to vector<13x128xf32>
    %687 = arith.mulf %686, %676 : vector<13x128xf32>
    %688 = arith.subf %640, %687 : vector<13x128xf32>
    %689 = vector.extract_strided_slice %644 {offsets = [7, 0], sizes = [1, 128], strides = [1, 1]} : vector<13x128xf32> to vector<1x128xf32>
    %690 = vector.broadcast %689 : vector<1x128xf32> to vector<13x128xf32>
    %691 = arith.mulf %690, %676 : vector<13x128xf32>
    %692 = arith.subf %644, %691 : vector<13x128xf32>
    %693 = vector.extract_strided_slice %648 {offsets = [7, 0], sizes = [1, 128], strides = [1, 1]} : vector<13x128xf32> to vector<1x128xf32>
    %694 = vector.broadcast %693 : vector<1x128xf32> to vector<13x128xf32>
    %695 = arith.mulf %694, %676 : vector<13x128xf32>
    %696 = arith.subf %648, %695 : vector<13x128xf32>
    %697 = vector.extract_strided_slice %652 {offsets = [7, 0], sizes = [1, 128], strides = [1, 1]} : vector<13x128xf32> to vector<1x128xf32>
    %698 = vector.broadcast %697 : vector<1x128xf32> to vector<13x128xf32>
    %699 = arith.mulf %698, %676 : vector<13x128xf32>
    %700 = arith.subf %652, %699 : vector<13x128xf32>
    %701 = vector.extract_strided_slice %628 {offsets = [7, 0], sizes = [1, 128], strides = [1, 1]} : vector<13x128xf32> to vector<1x128xf32>
    %702 = vector.broadcast %701 : vector<1x128xf32> to vector<13x128xf32>
    %703 = arith.mulf %702, %676 : vector<13x128xf32>
    %704 = arith.subf %628, %703 : vector<13x128xf32>
    %705 = vector.extract_strided_slice %660 {offsets = [7, 0], sizes = [1, 128], strides = [1, 1]} : vector<13x128xf32> to vector<1x128xf32>
    %706 = vector.broadcast %705 : vector<1x128xf32> to vector<13x128xf32>
    %707 = arith.mulf %706, %676 : vector<13x128xf32>
    %708 = arith.subf %660, %707 : vector<13x128xf32>
    %709 = vector.extract_strided_slice %664 {offsets = [7, 0], sizes = [1, 128], strides = [1, 1]} : vector<13x128xf32> to vector<1x128xf32>
    %710 = vector.broadcast %709 : vector<1x128xf32> to vector<13x128xf32>
    %711 = arith.mulf %710, %676 : vector<13x128xf32>
    %712 = arith.subf %664, %711 : vector<13x128xf32>
    %713 = vector.extract_strided_slice %668 {offsets = [7, 0], sizes = [1, 128], strides = [1, 1]} : vector<13x128xf32> to vector<1x128xf32>
    %714 = vector.broadcast %713 : vector<1x128xf32> to vector<13x128xf32>
    %715 = arith.mulf %714, %676 : vector<13x128xf32>
    %716 = arith.subf %668, %715 : vector<13x128xf32>
    %717 = vector.extract_strided_slice %672 {offsets = [7, 0], sizes = [1, 128], strides = [1, 1]} : vector<13x128xf32> to vector<1x128xf32>
    %718 = vector.broadcast %717 : vector<1x128xf32> to vector<13x128xf32>
    %719 = arith.mulf %718, %676 : vector<13x128xf32>
    %720 = arith.subf %672, %719 : vector<13x128xf32>
    %721 = vector.extract_strided_slice %708 {offsets = [8, 0], sizes = [1, 128], strides = [1, 1]} : vector<13x128xf32> to vector<1x128xf32>
    %722 = tpu.reciprocal %721 : vector<1x128xf32> -> vector<1x128xf32>
    %723 = vector.broadcast %722 : vector<1x128xf32> to vector<13x128xf32>
    %724 = arith.mulf %708, %723 : vector<13x128xf32>
    %725 = vector.extract_strided_slice %680 {offsets = [8, 0], sizes = [1, 128], strides = [1, 1]} : vector<13x128xf32> to vector<1x128xf32>
    %726 = vector.broadcast %725 : vector<1x128xf32> to vector<13x128xf32>
    %727 = arith.mulf %726, %724 : vector<13x128xf32>
    %728 = arith.subf %680, %727 : vector<13x128xf32>
    %729 = vector.extract_strided_slice %684 {offsets = [8, 0], sizes = [1, 128], strides = [1, 1]} : vector<13x128xf32> to vector<1x128xf32>
    %730 = vector.broadcast %729 : vector<1x128xf32> to vector<13x128xf32>
    %731 = arith.mulf %730, %724 : vector<13x128xf32>
    %732 = arith.subf %684, %731 : vector<13x128xf32>
    %733 = vector.extract_strided_slice %688 {offsets = [8, 0], sizes = [1, 128], strides = [1, 1]} : vector<13x128xf32> to vector<1x128xf32>
    %734 = vector.broadcast %733 : vector<1x128xf32> to vector<13x128xf32>
    %735 = arith.mulf %734, %724 : vector<13x128xf32>
    %736 = arith.subf %688, %735 : vector<13x128xf32>
    %737 = vector.extract_strided_slice %692 {offsets = [8, 0], sizes = [1, 128], strides = [1, 1]} : vector<13x128xf32> to vector<1x128xf32>
    %738 = vector.broadcast %737 : vector<1x128xf32> to vector<13x128xf32>
    %739 = arith.mulf %738, %724 : vector<13x128xf32>
    %740 = arith.subf %692, %739 : vector<13x128xf32>
    %741 = vector.extract_strided_slice %696 {offsets = [8, 0], sizes = [1, 128], strides = [1, 1]} : vector<13x128xf32> to vector<1x128xf32>
    %742 = vector.broadcast %741 : vector<1x128xf32> to vector<13x128xf32>
    %743 = arith.mulf %742, %724 : vector<13x128xf32>
    %744 = arith.subf %696, %743 : vector<13x128xf32>
    %745 = vector.extract_strided_slice %700 {offsets = [8, 0], sizes = [1, 128], strides = [1, 1]} : vector<13x128xf32> to vector<1x128xf32>
    %746 = vector.broadcast %745 : vector<1x128xf32> to vector<13x128xf32>
    %747 = arith.mulf %746, %724 : vector<13x128xf32>
    %748 = arith.subf %700, %747 : vector<13x128xf32>
    %749 = vector.extract_strided_slice %704 {offsets = [8, 0], sizes = [1, 128], strides = [1, 1]} : vector<13x128xf32> to vector<1x128xf32>
    %750 = vector.broadcast %749 : vector<1x128xf32> to vector<13x128xf32>
    %751 = arith.mulf %750, %724 : vector<13x128xf32>
    %752 = arith.subf %704, %751 : vector<13x128xf32>
    %753 = vector.extract_strided_slice %676 {offsets = [8, 0], sizes = [1, 128], strides = [1, 1]} : vector<13x128xf32> to vector<1x128xf32>
    %754 = vector.broadcast %753 : vector<1x128xf32> to vector<13x128xf32>
    %755 = arith.mulf %754, %724 : vector<13x128xf32>
    %756 = arith.subf %676, %755 : vector<13x128xf32>
    %757 = vector.extract_strided_slice %712 {offsets = [8, 0], sizes = [1, 128], strides = [1, 1]} : vector<13x128xf32> to vector<1x128xf32>
    %758 = vector.broadcast %757 : vector<1x128xf32> to vector<13x128xf32>
    %759 = arith.mulf %758, %724 : vector<13x128xf32>
    %760 = arith.subf %712, %759 : vector<13x128xf32>
    %761 = vector.extract_strided_slice %716 {offsets = [8, 0], sizes = [1, 128], strides = [1, 1]} : vector<13x128xf32> to vector<1x128xf32>
    %762 = vector.broadcast %761 : vector<1x128xf32> to vector<13x128xf32>
    %763 = arith.mulf %762, %724 : vector<13x128xf32>
    %764 = arith.subf %716, %763 : vector<13x128xf32>
    %765 = vector.extract_strided_slice %720 {offsets = [8, 0], sizes = [1, 128], strides = [1, 1]} : vector<13x128xf32> to vector<1x128xf32>
    %766 = vector.broadcast %765 : vector<1x128xf32> to vector<13x128xf32>
    %767 = arith.mulf %766, %724 : vector<13x128xf32>
    %768 = arith.subf %720, %767 : vector<13x128xf32>
    %769 = vector.extract_strided_slice %760 {offsets = [9, 0], sizes = [1, 128], strides = [1, 1]} : vector<13x128xf32> to vector<1x128xf32>
    %770 = tpu.reciprocal %769 : vector<1x128xf32> -> vector<1x128xf32>
    %771 = vector.broadcast %770 : vector<1x128xf32> to vector<13x128xf32>
    %772 = arith.mulf %760, %771 : vector<13x128xf32>
    %773 = vector.extract_strided_slice %728 {offsets = [9, 0], sizes = [1, 128], strides = [1, 1]} : vector<13x128xf32> to vector<1x128xf32>
    %774 = vector.broadcast %773 : vector<1x128xf32> to vector<13x128xf32>
    %775 = arith.mulf %774, %772 : vector<13x128xf32>
    %776 = arith.subf %728, %775 : vector<13x128xf32>
    %777 = vector.extract_strided_slice %732 {offsets = [9, 0], sizes = [1, 128], strides = [1, 1]} : vector<13x128xf32> to vector<1x128xf32>
    %778 = vector.broadcast %777 : vector<1x128xf32> to vector<13x128xf32>
    %779 = arith.mulf %778, %772 : vector<13x128xf32>
    %780 = arith.subf %732, %779 : vector<13x128xf32>
    %781 = vector.extract_strided_slice %736 {offsets = [9, 0], sizes = [1, 128], strides = [1, 1]} : vector<13x128xf32> to vector<1x128xf32>
    %782 = vector.broadcast %781 : vector<1x128xf32> to vector<13x128xf32>
    %783 = arith.mulf %782, %772 : vector<13x128xf32>
    %784 = arith.subf %736, %783 : vector<13x128xf32>
    %785 = vector.extract_strided_slice %740 {offsets = [9, 0], sizes = [1, 128], strides = [1, 1]} : vector<13x128xf32> to vector<1x128xf32>
    %786 = vector.broadcast %785 : vector<1x128xf32> to vector<13x128xf32>
    %787 = arith.mulf %786, %772 : vector<13x128xf32>
    %788 = arith.subf %740, %787 : vector<13x128xf32>
    %789 = vector.extract_strided_slice %744 {offsets = [9, 0], sizes = [1, 128], strides = [1, 1]} : vector<13x128xf32> to vector<1x128xf32>
    %790 = vector.broadcast %789 : vector<1x128xf32> to vector<13x128xf32>
    %791 = arith.mulf %790, %772 : vector<13x128xf32>
    %792 = arith.subf %744, %791 : vector<13x128xf32>
    %793 = vector.extract_strided_slice %748 {offsets = [9, 0], sizes = [1, 128], strides = [1, 1]} : vector<13x128xf32> to vector<1x128xf32>
    %794 = vector.broadcast %793 : vector<1x128xf32> to vector<13x128xf32>
    %795 = arith.mulf %794, %772 : vector<13x128xf32>
    %796 = arith.subf %748, %795 : vector<13x128xf32>
    %797 = vector.extract_strided_slice %752 {offsets = [9, 0], sizes = [1, 128], strides = [1, 1]} : vector<13x128xf32> to vector<1x128xf32>
    %798 = vector.broadcast %797 : vector<1x128xf32> to vector<13x128xf32>
    %799 = arith.mulf %798, %772 : vector<13x128xf32>
    %800 = arith.subf %752, %799 : vector<13x128xf32>
    %801 = vector.extract_strided_slice %756 {offsets = [9, 0], sizes = [1, 128], strides = [1, 1]} : vector<13x128xf32> to vector<1x128xf32>
    %802 = vector.broadcast %801 : vector<1x128xf32> to vector<13x128xf32>
    %803 = arith.mulf %802, %772 : vector<13x128xf32>
    %804 = arith.subf %756, %803 : vector<13x128xf32>
    %805 = vector.extract_strided_slice %724 {offsets = [9, 0], sizes = [1, 128], strides = [1, 1]} : vector<13x128xf32> to vector<1x128xf32>
    %806 = vector.broadcast %805 : vector<1x128xf32> to vector<13x128xf32>
    %807 = arith.mulf %806, %772 : vector<13x128xf32>
    %808 = arith.subf %724, %807 : vector<13x128xf32>
    %809 = vector.extract_strided_slice %764 {offsets = [9, 0], sizes = [1, 128], strides = [1, 1]} : vector<13x128xf32> to vector<1x128xf32>
    %810 = vector.broadcast %809 : vector<1x128xf32> to vector<13x128xf32>
    %811 = arith.mulf %810, %772 : vector<13x128xf32>
    %812 = arith.subf %764, %811 : vector<13x128xf32>
    %813 = vector.extract_strided_slice %768 {offsets = [9, 0], sizes = [1, 128], strides = [1, 1]} : vector<13x128xf32> to vector<1x128xf32>
    %814 = vector.broadcast %813 : vector<1x128xf32> to vector<13x128xf32>
    %815 = arith.mulf %814, %772 : vector<13x128xf32>
    %816 = arith.subf %768, %815 : vector<13x128xf32>
    %817 = vector.extract_strided_slice %812 {offsets = [10, 0], sizes = [1, 128], strides = [1, 1]} : vector<13x128xf32> to vector<1x128xf32>
    %818 = tpu.reciprocal %817 : vector<1x128xf32> -> vector<1x128xf32>
    %819 = vector.broadcast %818 : vector<1x128xf32> to vector<13x128xf32>
    %820 = arith.mulf %812, %819 : vector<13x128xf32>
    %821 = vector.extract_strided_slice %776 {offsets = [10, 0], sizes = [1, 128], strides = [1, 1]} : vector<13x128xf32> to vector<1x128xf32>
    %822 = vector.broadcast %821 : vector<1x128xf32> to vector<13x128xf32>
    %823 = arith.mulf %822, %820 : vector<13x128xf32>
    %824 = arith.subf %776, %823 : vector<13x128xf32>
    %825 = vector.extract_strided_slice %780 {offsets = [10, 0], sizes = [1, 128], strides = [1, 1]} : vector<13x128xf32> to vector<1x128xf32>
    %826 = vector.broadcast %825 : vector<1x128xf32> to vector<13x128xf32>
    %827 = arith.mulf %826, %820 : vector<13x128xf32>
    %828 = arith.subf %780, %827 : vector<13x128xf32>
    %829 = vector.extract_strided_slice %784 {offsets = [10, 0], sizes = [1, 128], strides = [1, 1]} : vector<13x128xf32> to vector<1x128xf32>
    %830 = vector.broadcast %829 : vector<1x128xf32> to vector<13x128xf32>
    %831 = arith.mulf %830, %820 : vector<13x128xf32>
    %832 = arith.subf %784, %831 : vector<13x128xf32>
    %833 = vector.extract_strided_slice %788 {offsets = [10, 0], sizes = [1, 128], strides = [1, 1]} : vector<13x128xf32> to vector<1x128xf32>
    %834 = vector.broadcast %833 : vector<1x128xf32> to vector<13x128xf32>
    %835 = arith.mulf %834, %820 : vector<13x128xf32>
    %836 = arith.subf %788, %835 : vector<13x128xf32>
    %837 = vector.extract_strided_slice %792 {offsets = [10, 0], sizes = [1, 128], strides = [1, 1]} : vector<13x128xf32> to vector<1x128xf32>
    %838 = vector.broadcast %837 : vector<1x128xf32> to vector<13x128xf32>
    %839 = arith.mulf %838, %820 : vector<13x128xf32>
    %840 = arith.subf %792, %839 : vector<13x128xf32>
    %841 = vector.extract_strided_slice %796 {offsets = [10, 0], sizes = [1, 128], strides = [1, 1]} : vector<13x128xf32> to vector<1x128xf32>
    %842 = vector.broadcast %841 : vector<1x128xf32> to vector<13x128xf32>
    %843 = arith.mulf %842, %820 : vector<13x128xf32>
    %844 = arith.subf %796, %843 : vector<13x128xf32>
    %845 = vector.extract_strided_slice %800 {offsets = [10, 0], sizes = [1, 128], strides = [1, 1]} : vector<13x128xf32> to vector<1x128xf32>
    %846 = vector.broadcast %845 : vector<1x128xf32> to vector<13x128xf32>
    %847 = arith.mulf %846, %820 : vector<13x128xf32>
    %848 = arith.subf %800, %847 : vector<13x128xf32>
    %849 = vector.extract_strided_slice %804 {offsets = [10, 0], sizes = [1, 128], strides = [1, 1]} : vector<13x128xf32> to vector<1x128xf32>
    %850 = vector.broadcast %849 : vector<1x128xf32> to vector<13x128xf32>
    %851 = arith.mulf %850, %820 : vector<13x128xf32>
    %852 = arith.subf %804, %851 : vector<13x128xf32>
    %853 = vector.extract_strided_slice %808 {offsets = [10, 0], sizes = [1, 128], strides = [1, 1]} : vector<13x128xf32> to vector<1x128xf32>
    %854 = vector.broadcast %853 : vector<1x128xf32> to vector<13x128xf32>
    %855 = arith.mulf %854, %820 : vector<13x128xf32>
    %856 = arith.subf %808, %855 : vector<13x128xf32>
    %857 = vector.extract_strided_slice %772 {offsets = [10, 0], sizes = [1, 128], strides = [1, 1]} : vector<13x128xf32> to vector<1x128xf32>
    %858 = vector.broadcast %857 : vector<1x128xf32> to vector<13x128xf32>
    %859 = arith.mulf %858, %820 : vector<13x128xf32>
    %860 = arith.subf %772, %859 : vector<13x128xf32>
    %861 = vector.extract_strided_slice %816 {offsets = [10, 0], sizes = [1, 128], strides = [1, 1]} : vector<13x128xf32> to vector<1x128xf32>
    %862 = vector.broadcast %861 : vector<1x128xf32> to vector<13x128xf32>
    %863 = arith.mulf %862, %820 : vector<13x128xf32>
    %864 = arith.subf %816, %863 : vector<13x128xf32>
    %865 = vector.extract_strided_slice %864 {offsets = [11, 0], sizes = [1, 128], strides = [1, 1]} : vector<13x128xf32> to vector<1x128xf32>
    %866 = tpu.reciprocal %865 : vector<1x128xf32> -> vector<1x128xf32>
    %867 = vector.broadcast %866 : vector<1x128xf32> to vector<13x128xf32>
    %868 = arith.mulf %864, %867 : vector<13x128xf32>
    %869 = vector.extract_strided_slice %824 {offsets = [11, 0], sizes = [1, 128], strides = [1, 1]} : vector<13x128xf32> to vector<1x128xf32>
    %870 = vector.broadcast %869 : vector<1x128xf32> to vector<13x128xf32>
    %871 = arith.mulf %870, %868 : vector<13x128xf32>
    %872 = arith.subf %824, %871 : vector<13x128xf32>
    %873 = vector.extract_strided_slice %828 {offsets = [11, 0], sizes = [1, 128], strides = [1, 1]} : vector<13x128xf32> to vector<1x128xf32>
    %874 = vector.broadcast %873 : vector<1x128xf32> to vector<13x128xf32>
    %875 = arith.mulf %874, %868 : vector<13x128xf32>
    %876 = arith.subf %828, %875 : vector<13x128xf32>
    %877 = vector.extract_strided_slice %832 {offsets = [11, 0], sizes = [1, 128], strides = [1, 1]} : vector<13x128xf32> to vector<1x128xf32>
    %878 = vector.broadcast %877 : vector<1x128xf32> to vector<13x128xf32>
    %879 = arith.mulf %878, %868 : vector<13x128xf32>
    %880 = arith.subf %832, %879 : vector<13x128xf32>
    %881 = vector.extract_strided_slice %836 {offsets = [11, 0], sizes = [1, 128], strides = [1, 1]} : vector<13x128xf32> to vector<1x128xf32>
    %882 = vector.broadcast %881 : vector<1x128xf32> to vector<13x128xf32>
    %883 = arith.mulf %882, %868 : vector<13x128xf32>
    %884 = arith.subf %836, %883 : vector<13x128xf32>
    %885 = vector.extract_strided_slice %840 {offsets = [11, 0], sizes = [1, 128], strides = [1, 1]} : vector<13x128xf32> to vector<1x128xf32>
    %886 = vector.broadcast %885 : vector<1x128xf32> to vector<13x128xf32>
    %887 = arith.mulf %886, %868 : vector<13x128xf32>
    %888 = arith.subf %840, %887 : vector<13x128xf32>
    %889 = vector.extract_strided_slice %844 {offsets = [11, 0], sizes = [1, 128], strides = [1, 1]} : vector<13x128xf32> to vector<1x128xf32>
    %890 = vector.broadcast %889 : vector<1x128xf32> to vector<13x128xf32>
    %891 = arith.mulf %890, %868 : vector<13x128xf32>
    %892 = arith.subf %844, %891 : vector<13x128xf32>
    %893 = vector.extract_strided_slice %848 {offsets = [11, 0], sizes = [1, 128], strides = [1, 1]} : vector<13x128xf32> to vector<1x128xf32>
    %894 = vector.broadcast %893 : vector<1x128xf32> to vector<13x128xf32>
    %895 = arith.mulf %894, %868 : vector<13x128xf32>
    %896 = arith.subf %848, %895 : vector<13x128xf32>
    %897 = vector.extract_strided_slice %852 {offsets = [11, 0], sizes = [1, 128], strides = [1, 1]} : vector<13x128xf32> to vector<1x128xf32>
    %898 = vector.broadcast %897 : vector<1x128xf32> to vector<13x128xf32>
    %899 = arith.mulf %898, %868 : vector<13x128xf32>
    %900 = arith.subf %852, %899 : vector<13x128xf32>
    %901 = vector.extract_strided_slice %856 {offsets = [11, 0], sizes = [1, 128], strides = [1, 1]} : vector<13x128xf32> to vector<1x128xf32>
    %902 = vector.broadcast %901 : vector<1x128xf32> to vector<13x128xf32>
    %903 = arith.mulf %902, %868 : vector<13x128xf32>
    %904 = arith.subf %856, %903 : vector<13x128xf32>
    %905 = vector.extract_strided_slice %860 {offsets = [11, 0], sizes = [1, 128], strides = [1, 1]} : vector<13x128xf32> to vector<1x128xf32>
    %906 = vector.broadcast %905 : vector<1x128xf32> to vector<13x128xf32>
    %907 = arith.mulf %906, %868 : vector<13x128xf32>
    %908 = arith.subf %860, %907 : vector<13x128xf32>
    %909 = vector.extract_strided_slice %820 {offsets = [11, 0], sizes = [1, 128], strides = [1, 1]} : vector<13x128xf32> to vector<1x128xf32>
    %910 = vector.broadcast %909 : vector<1x128xf32> to vector<13x128xf32>
    %911 = arith.mulf %910, %868 : vector<13x128xf32>
    %912 = arith.subf %820, %911 : vector<13x128xf32>
    %913 = vector.extract_strided_slice %872 {offsets = [12, 0], sizes = [1, 128], strides = [1, 1]} : vector<13x128xf32> to vector<1x128xf32>
    %914 = vector.extract_strided_slice %876 {offsets = [12, 0], sizes = [1, 128], strides = [1, 1]} : vector<13x128xf32> to vector<1x128xf32>
    %915 = vector.extract_strided_slice %880 {offsets = [12, 0], sizes = [1, 128], strides = [1, 1]} : vector<13x128xf32> to vector<1x128xf32>
    %916 = vector.extract_strided_slice %884 {offsets = [12, 0], sizes = [1, 128], strides = [1, 1]} : vector<13x128xf32> to vector<1x128xf32>
    %917 = vector.extract_strided_slice %888 {offsets = [12, 0], sizes = [1, 128], strides = [1, 1]} : vector<13x128xf32> to vector<1x128xf32>
    %918 = vector.extract_strided_slice %892 {offsets = [12, 0], sizes = [1, 128], strides = [1, 1]} : vector<13x128xf32> to vector<1x128xf32>
    %919 = vector.extract_strided_slice %896 {offsets = [12, 0], sizes = [1, 128], strides = [1, 1]} : vector<13x128xf32> to vector<1x128xf32>
    %920 = vector.extract_strided_slice %900 {offsets = [12, 0], sizes = [1, 128], strides = [1, 1]} : vector<13x128xf32> to vector<1x128xf32>
    %921 = vector.extract_strided_slice %904 {offsets = [12, 0], sizes = [1, 128], strides = [1, 1]} : vector<13x128xf32> to vector<1x128xf32>
    %922 = vector.extract_strided_slice %908 {offsets = [12, 0], sizes = [1, 128], strides = [1, 1]} : vector<13x128xf32> to vector<1x128xf32>
    %923 = vector.extract_strided_slice %912 {offsets = [12, 0], sizes = [1, 128], strides = [1, 1]} : vector<13x128xf32> to vector<1x128xf32>
    %924 = vector.extract_strided_slice %868 {offsets = [12, 0], sizes = [1, 128], strides = [1, 1]} : vector<13x128xf32> to vector<1x128xf32>
    %925 = tpu.concatenate %913, %914, %915, %916, %917, %918, %919, %920 in 0 : vector<1x128xf32>, vector<1x128xf32>, vector<1x128xf32>, vector<1x128xf32>, vector<1x128xf32>, vector<1x128xf32>, vector<1x128xf32>, vector<1x128xf32> -> vector<8x128xf32>
    %926 = vector.broadcast %913 : vector<1x128xf32> to vector<8x128xf32>
    %927 = arith.mulf %46, %926 : vector<8x128xf32>
    %928 = vector.broadcast %914 : vector<1x128xf32> to vector<8x128xf32>
    %929 = arith.mulf %77, %928 : vector<8x128xf32>
    %930 = arith.addf %927, %929 : vector<8x128xf32>
    %931 = vector.broadcast %915 : vector<1x128xf32> to vector<8x128xf32>
    %932 = arith.mulf %108, %931 : vector<8x128xf32>
    %933 = arith.addf %930, %932 : vector<8x128xf32>
    %934 = vector.broadcast %916 : vector<1x128xf32> to vector<8x128xf32>
    %935 = arith.mulf %139, %934 : vector<8x128xf32>
    %936 = arith.addf %933, %935 : vector<8x128xf32>
    %937 = vector.broadcast %917 : vector<1x128xf32> to vector<8x128xf32>
    %938 = arith.mulf %170, %937 : vector<8x128xf32>
    %939 = arith.addf %936, %938 : vector<8x128xf32>
    %940 = vector.broadcast %918 : vector<1x128xf32> to vector<8x128xf32>
    %941 = arith.mulf %201, %940 : vector<8x128xf32>
    %942 = arith.addf %939, %941 : vector<8x128xf32>
    %943 = vector.broadcast %919 : vector<1x128xf32> to vector<8x128xf32>
    %944 = arith.mulf %232, %943 : vector<8x128xf32>
    %945 = arith.addf %942, %944 : vector<8x128xf32>
    %946 = vector.broadcast %920 : vector<1x128xf32> to vector<8x128xf32>
    %947 = arith.mulf %263, %946 : vector<8x128xf32>
    %948 = arith.addf %945, %947 : vector<8x128xf32>
    %949 = vector.broadcast %921 : vector<1x128xf32> to vector<8x128xf32>
    %950 = arith.mulf %10, %949 : vector<8x128xf32>
    %951 = vector.broadcast %922 : vector<1x128xf32> to vector<8x128xf32>
    %952 = arith.mulf %11, %951 : vector<8x128xf32>
    %953 = arith.addf %950, %952 : vector<8x128xf32>
    %954 = vector.broadcast %923 : vector<1x128xf32> to vector<8x128xf32>
    %955 = arith.mulf %12, %954 : vector<8x128xf32>
    %956 = arith.addf %953, %955 : vector<8x128xf32>
    %957 = vector.broadcast %924 : vector<1x128xf32> to vector<8x128xf32>
    %958 = arith.mulf %13, %957 : vector<8x128xf32>
    %959 = arith.addf %956, %958 : vector<8x128xf32>
    %960 = arith.addf %948, %14 : vector<8x128xf32>
    %961 = arith.addf %960, %959 : vector<8x128xf32>
    %962 = arith.subf %925, %961 : vector<8x128xf32>
    %c0_10 = arith.constant 0 : index
    %c0_11 = arith.constant 0 : index
    %c0_12 = arith.constant 0 : index
    %963 = vector.load %arg2[%c0_10, %c0_11, %c0_12] : memref<1x8x128xf32, #tpu.memory_space<vmem>>, vector<1x8x128xf32>
    %964 = vector.shape_cast %963 : vector<1x8x128xf32> to vector<8x128xf32>
    %965 = vector.shape_cast %962 : vector<8x128xf32> to vector<1x8x128xf32>
    tpu.vector_store %arg2[%c0_10, %c0_11, %c0_12], %965 {strides = array<i32>} : memref<1x8x128xf32, #tpu.memory_space<vmem>>, vector<1x8x128xf32>,
    return
  }
  func.func @transform_0(%arg0: i32) -> (i32, i32, i32) {
    %c0_i32 = arith.constant 0 : i32
    %c0_i32_0 = arith.constant 0 : i32
    %c0_i32_1 = arith.constant 0 : i32
    return %arg0, %c0_i32, %c0_i32_0 : i32, i32, i32
  }
  func.func @transform_1(%arg0: i32) -> (i32, i32, i32) {
    %c0_i32 = arith.constant 0 : i32
    %c0_i32_0 = arith.constant 0 : i32
    %c0_i32_1 = arith.constant 0 : i32
    return %arg0, %c0_i32, %c0_i32_0 : i32, i32, i32
  }
}

</mosaic_0001>

<llo_original>
// kernel: opt_layer_forward.1
$region0: #{opt_layer_forward.1}
  #allocation0 [shape = 'u32[]', space=smem, size = 0x4, offset = 0x4, fixed_abs, tag = 'smem constant byte address 0x4 - core index']
  #allocation1 [shape = 'u32[144,128]{1,0:T(1,128)}', space=vmem, size = 0x12000, scoped, tag = 'internal scratch']
  %s0 = inlined_call_operand.vmem [shape: f32[1,108,128], index: 0, kind: input, shape index: {}]
  %s1 = inlined_call_operand.vmem [shape: f32[1,8,128], index: 1, kind: output, shape index: {}]
  %s2 = sld [smem:[#allocation0]]
  $region14: #{opt_layer_forward.1} parent=0
    _
  %s4 = ssub.s32 1, %s2
  %s5 = scalar_select 0, %s4, %s2
  // Predicated region
  $region2: #{opt_layer_forward.1} parent=0 // pred_check
    _
  $region3: #{opt_layer_forward.1} parent=0 // pred_check_branch
    %7 = sbr.rel (0) target = $region5
  $region4: #{opt_layer_forward.1} parent=0 // pred_region
    _
  $region5: #{opt_layer_forward.1} parent=0 // pred_fallthru
    _
  %v8 = vld [vmem:[%s0] sm:$0xff]
  %v9 = vld [vmem:[%s0 + $0x8] sm:$0xff]
  %v10 = vld [vmem:[%s0 + $0x10] sm:$0xff]
  %v11 = vld [vmem:[%s0 + $0x18] sm:$0xff]
  %v12 = vld [vmem:[%s0 + $0x20] sm:$0xff]
  %v13 = vld [vmem:[%s0 + $0x28] sm:$0xff]
  %v14 = vld [vmem:[%s0 + $0x30] sm:$0xff]
  %v15 = vld [vmem:[%s0 + $0x38] sm:$0xff]
  %v16 = vld [vmem:[%s0 + $0x40] sm:$0xff]
  %v17 = vld [vmem:[%s0 + $0x48] sm:$0xff]
  %v18 = vld [vmem:[%s0 + $0x50] sm:$0xff]
  %v19 = vld [vmem:[%s0 + $0x58] sm:$0xff]
  %v20 = vld [vmem:[%s0 + $0x60] sm:$0xff]
  %v21 = vld [vmem:[%s0 + $0x68] sm:$0xf]
  %v22 = vlaneseq
  %v23 = vshrl.u32 %v22, 7
  %v24 = vsub.s32 0, %v23
  %v25 = vrot.slane %v8, %v24
  %v26 = vmul.f32 %v25, %v8
  %v27 = vlaneseq
  %v28 = vshrl.u32 %v27, 7
  %v29 = vsub.s32 0, %v28
  %v30 = vrot.slane %v9, %v29
  %v31 = vmul.f32 %v30, %v9
  %v32 = vadd.f32 %v26, %v31
  %v33 = vlaneseq
  %v34 = vshrl.u32 %v33, 7
  %v35 = vsub.s32 0, %v34
  %v36 = vrot.slane %v10, %v35
  %v37 = vmul.f32 %v36, %v10
  %v38 = vadd.f32 %v32, %v37
  %v39 = vlaneseq
  %v40 = vshrl.u32 %v39, 7
  %v41 = vsub.s32 0, %v40
  %v42 = vrot.slane %v11, %v41
  %v43 = vmul.f32 %v42, %v11
  %v44 = vadd.f32 %v38, %v43
  %v45 = vlaneseq
  %v46 = vshrl.u32 %v45, 7
  %v47 = vsub.s32 0, %v46
  %v48 = vrot.slane %v12, %v47
  %v49 = vmul.f32 %v48, %v12
  %v50 = vadd.f32 %v44, %v49
  %v51 = vlaneseq
  %v52 = vshrl.u32 %v51, 7
  %v53 = vsub.s32 0, %v52
  %v54 = vrot.slane %v13, %v53
  %v55 = vmul.f32 %v54, %v13
  %v56 = vadd.f32 %v50, %v55
  %v57 = vlaneseq
  %v58 = vshrl.u32 %v57, 7
  %v59 = vsub.s32 0, %v58
  %v60 = vrot.slane %v14, %v59
  %v61 = vmul.f32 %v60, %v14
  %v62 = vadd.f32 %v56, %v61
  %v63 = vlaneseq
  %v64 = vshrl.u32 %v63, 7
  %v65 = vsub.s32 0, %v64
  %v66 = vrot.slane %v15, %v65
  %v67 = vmul.f32 %v66, %v15
  %v68 = vadd.f32 %v62, %v67
  %v69 = vlaneseq
  %v70 = vshrl.u32 %v69, 7
  %v71 = vsub.s32 1, %v70
  %v72 = vrot.slane %v8, %v71
  %v73 = vmul.f32 %v72, %v8
  %v74 = vlaneseq
  %v75 = vshrl.u32 %v74, 7
  %v76 = vsub.s32 1, %v75
  %v77 = vrot.slane %v9, %v76
  %v78 = vmul.f32 %v77, %v9
  %v79 = vadd.f32 %v73, %v78
  %v80 = vlaneseq
  %v81 = vshrl.u32 %v80, 7
  %v82 = vsub.s32 1, %v81
  %v83 = vrot.slane %v10, %v82
  %v84 = vmul.f32 %v83, %v10
  %v85 = vadd.f32 %v79, %v84
  %v86 = vlaneseq
  %v87 = vshrl.u32 %v86, 7
  %v88 = vsub.s32 1, %v87
  %v89 = vrot.slane %v11, %v88
  %v90 = vmul.f32 %v89, %v11
  %v91 = vadd.f32 %v85, %v90
  %v92 = vlaneseq
  %v93 = vshrl.u32 %v92, 7
  %v94 = vsub.s32 1, %v93
  %v95 = vrot.slane %v12, %v94
  %v96 = vmul.f32 %v95, %v12
  %v97 = vadd.f32 %v91, %v96
  %v98 = vlaneseq
  %v99 = vshrl.u32 %v98, 7
  %v100 = vsub.s32 1, %v99
  %v101 = vrot.slane %v13, %v100
  %v102 = vmul.f32 %v101, %v13
  %v103 = vadd.f32 %v97, %v102
  %v104 = vlaneseq
  %v105 = vshrl.u32 %v104, 7
  %v106 = vsub.s32 1, %v105
  %v107 = vrot.slane %v14, %v106
  %v108 = vmul.f32 %v107, %v14
  %v109 = vadd.f32 %v103, %v108
  %v110 = vlaneseq
  %v111 = vshrl.u32 %v110, 7
  %v112 = vsub.s32 1, %v111
  %v113 = vrot.slane %v15, %v112
  %v114 = vmul.f32 %v113, %v15
  %v115 = vadd.f32 %v109, %v114
  %v116 = vlaneseq
  %v117 = vshrl.u32 %v116, 7
  %v118 = vsub.s32 2, %v117
  %v119 = vrot.slane %v8, %v118
  %v120 = vmul.f32 %v119, %v8
  %v121 = vlaneseq
  %v122 = vshrl.u32 %v121, 7
  %v123 = vsub.s32 2, %v122
  %v124 = vrot.slane %v9, %v123
  %v125 = vmul.f32 %v124, %v9
  %v126 = vadd.f32 %v120, %v125
  %v127 = vlaneseq
  %v128 = vshrl.u32 %v127, 7
  %v129 = vsub.s32 2, %v128
  %v130 = vrot.slane %v10, %v129
  %v131 = vmul.f32 %v130, %v10
  %v132 = vadd.f32 %v126, %v131
  %v133 = vlaneseq
  %v134 = vshrl.u32 %v133, 7
  %v135 = vsub.s32 2, %v134
  %v136 = vrot.slane %v11, %v135
  %v137 = vmul.f32 %v136, %v11
  %v138 = vadd.f32 %v132, %v137
  %v139 = vlaneseq
  %v140 = vshrl.u32 %v139, 7
  %v141 = vsub.s32 2, %v140
  %v142 = vrot.slane %v12, %v141
  %v143 = vmul.f32 %v142, %v12
  %v144 = vadd.f32 %v138, %v143
  %v145 = vlaneseq
  %v146 = vshrl.u32 %v145, 7
  %v147 = vsub.s32 2, %v146
  %v148 = vrot.slane %v13, %v147
  %v149 = vmul.f32 %v148, %v13
  %v150 = vadd.f32 %v144, %v149
  %v151 = vlaneseq
  %v152 = vshrl.u32 %v151, 7
  %v153 = vsub.s32 2, %v152
  %v154 = vrot.slane %v14, %v153
  %v155 = vmul.f32 %v154, %v14
  %v156 = vadd.f32 %v150, %v155
  %v157 = vlaneseq
  %v158 = vshrl.u32 %v157, 7
  %v159 = vsub.s32 2, %v158
  %v160 = vrot.slane %v15, %v159
  %v161 = vmul.f32 %v160, %v15
  %v162 = vadd.f32 %v156, %v161
  %v163 = vlaneseq
  %v164 = vshrl.u32 %v163, 7
  %v165 = vsub.s32 3, %v164
  %v166 = vrot.slane %v8, %v165
  %v167 = vmul.f32 %v166, %v8
  %v168 = vlaneseq
  %v169 = vshrl.u32 %v168, 7
  %v170 = vsub.s32 3, %v169
  %v171 = vrot.slane %v9, %v170
  %v172 = vmul.f32 %v171, %v9
  %v173 = vadd.f32 %v167, %v172
  %v174 = vlaneseq
  %v175 = vshrl.u32 %v174, 7
  %v176 = vsub.s32 3, %v175
  %v177 = vrot.slane %v10, %v176
  %v178 = vmul.f32 %v177, %v10
  %v179 = vadd.f32 %v173, %v178
  %v180 = vlaneseq
  %v181 = vshrl.u32 %v180, 7
  %v182 = vsub.s32 3, %v181
  %v183 = vrot.slane %v11, %v182
  %v184 = vmul.f32 %v183, %v11
  %v185 = vadd.f32 %v179, %v184
  %v186 = vlaneseq
  %v187 = vshrl.u32 %v186, 7
  %v188 = vsub.s32 3, %v187
  %v189 = vrot.slane %v12, %v188
  %v190 = vmul.f32 %v189, %v12
  %v191 = vadd.f32 %v185, %v190
  %v192 = vlaneseq
  %v193 = vshrl.u32 %v192, 7
  %v194 = vsub.s32 3, %v193
  %v195 = vrot.slane %v13, %v194
  %v196 = vmul.f32 %v195, %v13
  %v197 = vadd.f32 %v191, %v196
  %v198 = vlaneseq
  %v199 = vshrl.u32 %v198, 7
  %v200 = vsub.s32 3, %v199
  %v201 = vrot.slane %v14, %v200
  %v202 = vmul.f32 %v201, %v14
  %v203 = vadd.f32 %v197, %v202
  %v204 = vlaneseq
  %v205 = vshrl.u32 %v204, 7
  %v206 = vsub.s32 3, %v205
  %v207 = vrot.slane %v15, %v206
  %v208 = vmul.f32 %v207, %v15
  %v209 = vadd.f32 %v203, %v208
  %v210 = vlaneseq
  %v211 = vshrl.u32 %v210, 7
  %v212 = vsub.s32 4, %v211
  %v213 = vrot.slane %v8, %v212
  %v214 = vmul.f32 %v213, %v8
  %v215 = vlaneseq
  %v216 = vshrl.u32 %v215, 7
  %v217 = vsub.s32 4, %v216
  %v218 = vrot.slane %v9, %v217
  %v219 = vmul.f32 %v218, %v9
  %v220 = vadd.f32 %v214, %v219
  %v221 = vlaneseq
  %v222 = vshrl.u32 %v221, 7
  %v223 = vsub.s32 4, %v222
  %v224 = vrot.slane %v10, %v223
  %v225 = vmul.f32 %v224, %v10
  %v226 = vadd.f32 %v220, %v225
  %v227 = vlaneseq
  %v228 = vshrl.u32 %v227, 7
  %v229 = vsub.s32 4, %v228
  %v230 = vrot.slane %v11, %v229
  %v231 = vmul.f32 %v230, %v11
  %v232 = vadd.f32 %v226, %v231
  %v233 = vlaneseq
  %v234 = vshrl.u32 %v233, 7
  %v235 = vsub.s32 4, %v234
  %v236 = vrot.slane %v12, %v235
  %v237 = vmul.f32 %v236, %v12
  %v238 = vadd.f32 %v232, %v237
  %v239 = vlaneseq
  %v240 = vshrl.u32 %v239, 7
  %v241 = vsub.s32 4, %v240
  %v242 = vrot.slane %v13, %v241
  %v243 = vmul.f32 %v242, %v13
  %v244 = vadd.f32 %v238, %v243
  %v245 = vlaneseq
  %v246 = vshrl.u32 %v245, 7
  %v247 = vsub.s32 4, %v246
  %v248 = vrot.slane %v14, %v247
  %v249 = vmul.f32 %v248, %v14
  %v250 = vadd.f32 %v244, %v249
  %v251 = vlaneseq
  %v252 = vshrl.u32 %v251, 7
  %v253 = vsub.s32 4, %v252
  %v254 = vrot.slane %v15, %v253
  %v255 = vmul.f32 %v254, %v15
  %v256 = vadd.f32 %v250, %v255
  %v257 = vlaneseq
  %v258 = vshrl.u32 %v257, 7
  %v259 = vsub.s32 5, %v258
  %v260 = vrot.slane %v8, %v259
  %v261 = vmul.f32 %v260, %v8
  %v262 = vlaneseq
  %v263 = vshrl.u32 %v262, 7
  %v264 = vsub.s32 5, %v263
  %v265 = vrot.slane %v9, %v264
  %v266 = vmul.f32 %v265, %v9
  %v267 = vadd.f32 %v261, %v266
  %v268 = vlaneseq
  %v269 = vshrl.u32 %v268, 7
  %v270 = vsub.s32 5, %v269
  %v271 = vrot.slane %v10, %v270
  %v272 = vmul.f32 %v271, %v10
  %v273 = vadd.f32 %v267, %v272
  %v274 = vlaneseq
  %v275 = vshrl.u32 %v274, 7
  %v276 = vsub.s32 5, %v275
  %v277 = vrot.slane %v11, %v276
  %v278 = vmul.f32 %v277, %v11
  %v279 = vadd.f32 %v273, %v278
  %v280 = vlaneseq
  %v281 = vshrl.u32 %v280, 7
  %v282 = vsub.s32 5, %v281
  %v283 = vrot.slane %v12, %v282
  %v284 = vmul.f32 %v283, %v12
  %v285 = vadd.f32 %v279, %v284
  %v286 = vlaneseq
  %v287 = vshrl.u32 %v286, 7
  %v288 = vsub.s32 5, %v287
  %v289 = vrot.slane %v13, %v288
  %v290 = vmul.f32 %v289, %v13
  %v291 = vadd.f32 %v285, %v290
  %v292 = vlaneseq
  %v293 = vshrl.u32 %v292, 7
  %v294 = vsub.s32 5, %v293
  %v295 = vrot.slane %v14, %v294
  %v296 = vmul.f32 %v295, %v14
  %v297 = vadd.f32 %v291, %v296
  %v298 = vlaneseq
  %v299 = vshrl.u32 %v298, 7
  %v300 = vsub.s32 5, %v299
  %v301 = vrot.slane %v15, %v300
  %v302 = vmul.f32 %v301, %v15
  %v303 = vadd.f32 %v297, %v302
  %v304 = vlaneseq
  %v305 = vshrl.u32 %v304, 7
  %v306 = vsub.s32 6, %v305
  %v307 = vrot.slane %v8, %v306
  %v308 = vmul.f32 %v307, %v8
  %v309 = vlaneseq
  %v310 = vshrl.u32 %v309, 7
  %v311 = vsub.s32 6, %v310
  %v312 = vrot.slane %v9, %v311
  %v313 = vmul.f32 %v312, %v9
  %v314 = vadd.f32 %v308, %v313
  %v315 = vlaneseq
  %v316 = vshrl.u32 %v315, 7
  %v317 = vsub.s32 6, %v316
  %v318 = vrot.slane %v10, %v317
  %v319 = vmul.f32 %v318, %v10
  %v320 = vadd.f32 %v314, %v319
  %v321 = vlaneseq
  %v322 = vshrl.u32 %v321, 7
  %v323 = vsub.s32 6, %v322
  %v324 = vrot.slane %v11, %v323
  %v325 = vmul.f32 %v324, %v11
  %v326 = vadd.f32 %v320, %v325
  %v327 = vlaneseq
  %v328 = vshrl.u32 %v327, 7
  %v329 = vsub.s32 6, %v328
  %v330 = vrot.slane %v12, %v329
  %v331 = vmul.f32 %v330, %v12
  %v332 = vadd.f32 %v326, %v331
  %v333 = vlaneseq
  %v334 = vshrl.u32 %v333, 7
  %v335 = vsub.s32 6, %v334
  %v336 = vrot.slane %v13, %v335
  %v337 = vmul.f32 %v336, %v13
  %v338 = vadd.f32 %v332, %v337
  %v339 = vlaneseq
  %v340 = vshrl.u32 %v339, 7
  %v341 = vsub.s32 6, %v340
  %v342 = vrot.slane %v14, %v341
  %v343 = vmul.f32 %v342, %v14
  %v344 = vadd.f32 %v338, %v343
  %v345 = vlaneseq
  %v346 = vshrl.u32 %v345, 7
  %v347 = vsub.s32 6, %v346
  %v348 = vrot.slane %v15, %v347
  %v349 = vmul.f32 %v348, %v15
  %v350 = vadd.f32 %v344, %v349
  %v351 = vlaneseq
  %v352 = vshrl.u32 %v351, 7
  %v353 = vsub.s32 7, %v352
  %v354 = vrot.slane %v8, %v353
  %v355 = vmul.f32 %v354, %v8
  %v356 = vlaneseq
  %v357 = vshrl.u32 %v356, 7
  %v358 = vsub.s32 7, %v357
  %v359 = vrot.slane %v9, %v358
  %v360 = vmul.f32 %v359, %v9
  %v361 = vadd.f32 %v355, %v360
  %v362 = vlaneseq
  %v363 = vshrl.u32 %v362, 7
  %v364 = vsub.s32 7, %v363
  %v365 = vrot.slane %v10, %v364
  %v366 = vmul.f32 %v365, %v10
  %v367 = vadd.f32 %v361, %v366
  %v368 = vlaneseq
  %v369 = vshrl.u32 %v368, 7
  %v370 = vsub.s32 7, %v369
  %v371 = vrot.slane %v11, %v370
  %v372 = vmul.f32 %v371, %v11
  %v373 = vadd.f32 %v367, %v372
  %v374 = vlaneseq
  %v375 = vshrl.u32 %v374, 7
  %v376 = vsub.s32 7, %v375
  %v377 = vrot.slane %v12, %v376
  %v378 = vmul.f32 %v377, %v12
  %v379 = vadd.f32 %v373, %v378
  %v380 = vlaneseq
  %v381 = vshrl.u32 %v380, 7
  %v382 = vsub.s32 7, %v381
  %v383 = vrot.slane %v13, %v382
  %v384 = vmul.f32 %v383, %v13
  %v385 = vadd.f32 %v379, %v384
  %v386 = vlaneseq
  %v387 = vshrl.u32 %v386, 7
  %v388 = vsub.s32 7, %v387
  %v389 = vrot.slane %v14, %v388
  %v390 = vmul.f32 %v389, %v14
  %v391 = vadd.f32 %v385, %v390
  %v392 = vlaneseq
  %v393 = vshrl.u32 %v392, 7
  %v394 = vsub.s32 7, %v393
  %v395 = vrot.slane %v15, %v394
  %v396 = vmul.f32 %v395, %v15
  %v397 = vadd.f32 %v391, %v396
  %v398 = vsub.f32 0.0, %v20
  %v400 = vrot.slane %v17, 7
  %v403 = vrot.slane %v18, 6
  %v406 = vrot.slane %v19, 5
  %v409 = vrot.slane %v398, 4
  %vm411 = vcmask 1040384
  %v412 = vsel %vm411, %v16, %v400
  %vm413 = vcmask 1041408
  %v414 = vsel %vm413, %v412, %v403
  %vm415 = vcmask 1042432
  %v416 = vsel %vm415, %v414, %v406
  %vm417 = vcmask 1043456
  %v418 = vsel %vm417, %v416, %v409
  %v420 = vrot.slane %v16, 1
  %v422 = vrot.slane %v18, 7
  %v424 = vrot.slane %v19, 6
  %v426 = vrot.slane %v398, 5
  %v428 = vsel %vm411, %v420, %v17
  %v429 = vsel %vm413, %v428, %v422
  %v430 = vsel %vm415, %v429, %v424
  %v431 = vsel %vm417, %v430, %v426
  %v432 = vrot.slane %v16, 2
  %v434 = vrot.slane %v17, 1
  %v436 = vrot.slane %v19, 7
  %v438 = vrot.slane %v398, 6
  %v440 = vsel %vm411, %v432, %v434
  %v441 = vsel %vm413, %v440, %v18
  %v442 = vsel %vm415, %v441, %v436
  %v443 = vsel %vm417, %v442, %v438
  %v444 = vrot.slane %v16, 3
  %v446 = vrot.slane %v17, 2
  %v448 = vrot.slane %v18, 1
  %v450 = vrot.slane %v398, 7
  %v452 = vsel %vm411, %v444, %v446
  %v453 = vsel %vm413, %v452, %v448
  %v454 = vsel %vm415, %v453, %v19
  %v455 = vsel %vm417, %v454, %v450
  %v456 = vrot.slane %v16, 4
  %v458 = vrot.slane %v17, 3
  %v460 = vrot.slane %v18, 2
  %v462 = vrot.slane %v19, 1
  %v464 = vsel %vm411, %v456, %v458
  %v465 = vsel %vm413, %v464, %v460
  %v466 = vsel %vm415, %v465, %v462
  %v467 = vsel %vm417, %v466, %v398
  %v468 = vrot.slane %v16, 5
  %v470 = vrot.slane %v17, 4
  %v472 = vrot.slane %v18, 3
  %v474 = vrot.slane %v19, 2
  %v476 = vrot.slane %v398, 1
  %v478 = vsel %vm411, %v468, %v470
  %v479 = vsel %vm413, %v478, %v472
  %v480 = vsel %vm415, %v479, %v474
  %v481 = vsel %vm417, %v480, %v476
  %v482 = vrot.slane %v16, 6
  %v484 = vrot.slane %v17, 5
  %v486 = vrot.slane %v18, 4
  %v488 = vrot.slane %v19, 3
  %v490 = vrot.slane %v398, 2
  %v492 = vsel %vm411, %v482, %v484
  %v493 = vsel %vm413, %v492, %v486
  %v494 = vsel %vm415, %v493, %v488
  %v495 = vsel %vm417, %v494, %v490
  %v496 = vrot.slane %v16, 7
  %v498 = vrot.slane %v17, 6
  %v500 = vrot.slane %v18, 5
  %v502 = vrot.slane %v19, 4
  %v504 = vrot.slane %v398, 3
  %v506 = vsel %vm411, %v496, %v498
  %v507 = vsel %vm413, %v506, %v500
  %v508 = vsel %vm415, %v507, %v502
  %v509 = vsel %vm417, %v508, %v504
  %v511 = vrot.slane %v21, 4
  %v513 = vsel %vm417, 0.0, %v511
  %v514 = vrot.slane %v21, 5
  %v516 = vsel %vm417, 0.0, %v514
  %v517 = vrot.slane %v21, 6
  %v519 = vsel %vm417, 0.0, %v517
  %v520 = vrot.slane %v21, 7
  %v522 = vsel %vm417, 0.0, %v520
  %v523 = vrcp.pop %v68
  %v524 = vlaneseq
  %v525 = vshrl.u32 %v524, 7
  %v526 = vsub.s32 0, %v525
  %v527 = vrot.slane %v523, %v526
  %v528 = vmul.f32 %v68, %v527
  %v529 = vmul.f32 %v418, %v527
  %v530 = vlaneseq
  %v531 = vshrl.u32 %v530, 7
  %v532 = vsub.s32 0, %v531
  %v533 = vrot.slane %v115, %v532
  %v534 = vmul.f32 %v533, %v528
  %v535 = vmul.f32 %v533, %v529
  %v536 = vsub.f32 %v115, %v534
  %v537 = vsub.f32 %v431, %v535
  %v538 = vlaneseq
  %v539 = vshrl.u32 %v538, 7
  %v540 = vsub.s32 0, %v539
  %v541 = vrot.slane %v162, %v540
  %v542 = vmul.f32 %v541, %v528
  %v543 = vmul.f32 %v541, %v529
  %v544 = vsub.f32 %v162, %v542
  %v545 = vsub.f32 %v443, %v543
  %v546 = vlaneseq
  %v547 = vshrl.u32 %v546, 7
  %v548 = vsub.s32 0, %v547
  %v549 = vrot.slane %v209, %v548
  %v550 = vmul.f32 %v549, %v528
  %v551 = vmul.f32 %v549, %v529
  %v552 = vsub.f32 %v209, %v550
  %v553 = vsub.f32 %v455, %v551
  %v554 = vlaneseq
  %v555 = vshrl.u32 %v554, 7
  %v556 = vsub.s32 0, %v555
  %v557 = vrot.slane %v256, %v556
  %v558 = vmul.f32 %v557, %v528
  %v559 = vmul.f32 %v557, %v529
  %v560 = vsub.f32 %v256, %v558
  %v561 = vsub.f32 %v467, %v559
  %v562 = vlaneseq
  %v563 = vshrl.u32 %v562, 7
  %v564 = vsub.s32 0, %v563
  %v565 = vrot.slane %v303, %v564
  %v566 = vmul.f32 %v565, %v528
  %v567 = vmul.f32 %v565, %v529
  %v568 = vsub.f32 %v303, %v566
  %v569 = vsub.f32 %v481, %v567
  %v570 = vlaneseq
  %v571 = vshrl.u32 %v570, 7
  %v572 = vsub.s32 0, %v571
  %v573 = vrot.slane %v350, %v572
  %v574 = vmul.f32 %v573, %v528
  %v575 = vmul.f32 %v573, %v529
  %v576 = vsub.f32 %v350, %v574
  %v577 = vsub.f32 %v495, %v575
  %v578 = vlaneseq
  %v579 = vshrl.u32 %v578, 7
  %v580 = vsub.s32 0, %v579
  %v581 = vrot.slane %v397, %v580
  %v582 = vmul.f32 %v581, %v528
  %v583 = vmul.f32 %v581, %v529
  %v584 = vsub.f32 %v397, %v582
  %v585 = vsub.f32 %v509, %v583
  %v586 = vlaneseq
  %v587 = vshrl.u32 %v586, 7
  %v588 = vsub.s32 0, %v587
  %v589 = vrot.slane %v16, %v588
  %v590 = vmul.f32 %v589, %v528
  %v591 = vmul.f32 %v589, %v529
  %v592 = vsub.f32 %v16, %v590
  %v593 = vsub.f32 %v513, %v591
  %v594 = vlaneseq
  %v595 = vshrl.u32 %v594, 7
  %v596 = vsub.s32 0, %v595
  %v597 = vrot.slane %v17, %v596
  %v598 = vmul.f32 %v597, %v528
  %v599 = vmul.f32 %v597, %v529
  %v600 = vsub.f32 %v17, %v598
  %v601 = vsub.f32 %v516, %v599
  %v602 = vlaneseq
  %v603 = vshrl.u32 %v602, 7
  %v604 = vsub.s32 0, %v603
  %v605 = vrot.slane %v18, %v604
  %v606 = vmul.f32 %v605, %v528
  %v607 = vmul.f32 %v605, %v529
  %v608 = vsub.f32 %v18, %v606
  %v609 = vsub.f32 %v519, %v607
  %v610 = vlaneseq
  %v611 = vshrl.u32 %v610, 7
  %v612 = vsub.s32 0, %v611
  %v613 = vrot.slane %v19, %v612
  %v614 = vmul.f32 %v613, %v528
  %v615 = vmul.f32 %v613, %v529
  %v616 = vsub.f32 %v19, %v614
  %v617 = vsub.f32 %v522, %v615
  %v618 = vrcp.pop %v536
  %v619 = vlaneseq
  %v620 = vshrl.u32 %v619, 7
  %v621 = vsub.s32 1, %v620
  %v622 = vrot.slane %v618, %v621
  %v623 = vmul.f32 %v536, %v622
  %v624 = vmul.f32 %v537, %v622
  %v625 = vlaneseq
  %v626 = vshrl.u32 %v625, 7
  %v627 = vsub.s32 1, %v626
  %v628 = vrot.slane %v528, %v627
  %v629 = vmul.f32 %v628, %v623
  %v630 = vmul.f32 %v628, %v624
  %v631 = vsub.f32 %v528, %v629
  %v632 = vsub.f32 %v529, %v630
  %v633 = vlaneseq
  %v634 = vshrl.u32 %v633, 7
  %v635 = vsub.s32 1, %v634
  %v636 = vrot.slane %v544, %v635
  %v637 = vmul.f32 %v636, %v623
  %v638 = vmul.f32 %v636, %v624
  %v639 = vsub.f32 %v544, %v637
  %v640 = vsub.f32 %v545, %v638
  %v641 = vlaneseq
  %v642 = vshrl.u32 %v641, 7
  %v643 = vsub.s32 1, %v642
  %v644 = vrot.slane %v552, %v643
  %v645 = vmul.f32 %v644, %v623
  %v646 = vmul.f32 %v644, %v624
  %v647 = vsub.f32 %v552, %v645
  %v648 = vsub.f32 %v553, %v646
  %v649 = vlaneseq
  %v650 = vshrl.u32 %v649, 7
  %v651 = vsub.s32 1, %v650
  %v652 = vrot.slane %v560, %v651
  %v653 = vmul.f32 %v652, %v623
  %v654 = vmul.f32 %v652, %v624
  %v655 = vsub.f32 %v560, %v653
  %v656 = vsub.f32 %v561, %v654
  %v657 = vlaneseq
  %v658 = vshrl.u32 %v657, 7
  %v659 = vsub.s32 1, %v658
  %v660 = vrot.slane %v568, %v659
  %v661 = vmul.f32 %v660, %v623
  %v662 = vmul.f32 %v660, %v624
  %v663 = vsub.f32 %v568, %v661
  %v664 = vsub.f32 %v569, %v662
  %v665 = vlaneseq
  %v666 = vshrl.u32 %v665, 7
  %v667 = vsub.s32 1, %v666
  %v668 = vrot.slane %v576, %v667
  %v669 = vmul.f32 %v668, %v623
  %v670 = vmul.f32 %v668, %v624
  %v671 = vsub.f32 %v576, %v669
  %v672 = vsub.f32 %v577, %v670
  %v673 = vlaneseq
  %v674 = vshrl.u32 %v673, 7
  %v675 = vsub.s32 1, %v674
  %v676 = vrot.slane %v584, %v675
  %v677 = vmul.f32 %v676, %v623
  %v678 = vmul.f32 %v676, %v624
  %v679 = vsub.f32 %v584, %v677
  %v680 = vsub.f32 %v585, %v678
  %v681 = vlaneseq
  %v682 = vshrl.u32 %v681, 7
  %v683 = vsub.s32 1, %v682
  %v684 = vrot.slane %v592, %v683
  %v685 = vmul.f32 %v684, %v623
  %v686 = vmul.f32 %v684, %v624
  %v687 = vsub.f32 %v592, %v685
  %v688 = vsub.f32 %v593, %v686
  %v689 = vlaneseq
  %v690 = vshrl.u32 %v689, 7
  %v691 = vsub.s32 1, %v690
  %v692 = vrot.slane %v600, %v691
  %v693 = vmul.f32 %v692, %v623
  %v694 = vmul.f32 %v692, %v624
  %v695 = vsub.f32 %v600, %v693
  %v696 = vsub.f32 %v601, %v694
  %v697 = vlaneseq
  %v698 = vshrl.u32 %v697, 7
  %v699 = vsub.s32 1, %v698
  %v700 = vrot.slane %v608, %v699
  %v701 = vmul.f32 %v700, %v623
  %v702 = vmul.f32 %v700, %v624
  %v703 = vsub.f32 %v608, %v701
  %v704 = vsub.f32 %v609, %v702
  %v705 = vlaneseq
  %v706 = vshrl.u32 %v705, 7
  %v707 = vsub.s32 1, %v706
  %v708 = vrot.slane %v616, %v707
  %v709 = vmul.f32 %v708, %v623
  %v710 = vmul.f32 %v708, %v624
  %v711 = vsub.f32 %v616, %v709
  %v712 = vsub.f32 %v617, %v710
  %v713 = vrcp.pop %v639
  %v714 = vlaneseq
  %v715 = vshrl.u32 %v714, 7
  %v716 = vsub.s32 2, %v715
  %v717 = vrot.slane %v713, %v716
  %v718 = vmul.f32 %v639, %v717
  %v719 = vmul.f32 %v640, %v717
  %v720 = vlaneseq
  %v721 = vshrl.u32 %v720, 7
  %v722 = vsub.s32 2, %v721
  %v723 = vrot.slane %v631, %v722
  %v724 = vmul.f32 %v723, %v718
  %v725 = vmul.f32 %v723, %v719
  %v726 = vsub.f32 %v631, %v724
  %v727 = vsub.f32 %v632, %v725
  %v728 = vlaneseq
  %v729 = vshrl.u32 %v728, 7
  %v730 = vsub.s32 2, %v729
  %v731 = vrot.slane %v623, %v730
  %v732 = vmul.f32 %v731, %v718
  %v733 = vmul.f32 %v731, %v719
  %v734 = vsub.f32 %v623, %v732
  %v735 = vsub.f32 %v624, %v733
  %v736 = vlaneseq
  %v737 = vshrl.u32 %v736, 7
  %v738 = vsub.s32 2, %v737
  %v739 = vrot.slane %v647, %v738
  %v740 = vmul.f32 %v739, %v718
  %v741 = vmul.f32 %v739, %v719
  %v742 = vsub.f32 %v647, %v740
  %v743 = vsub.f32 %v648, %v741
  %v744 = vlaneseq
  %v745 = vshrl.u32 %v744, 7
  %v746 = vsub.s32 2, %v745
  %v747 = vrot.slane %v655, %v746
  %v748 = vmul.f32 %v747, %v718
  %v749 = vmul.f32 %v747, %v719
  %v750 = vsub.f32 %v655, %v748
  %v751 = vsub.f32 %v656, %v749
  %v752 = vlaneseq
  %v753 = vshrl.u32 %v752, 7
  %v754 = vsub.s32 2, %v753
  %v755 = vrot.slane %v663, %v754
  %v756 = vmul.f32 %v755, %v718
  %v757 = vmul.f32 %v755, %v719
  %v758 = vsub.f32 %v663, %v756
  %v759 = vsub.f32 %v664, %v757
  %v760 = vlaneseq
  %v761 = vshrl.u32 %v760, 7
  %v762 = vsub.s32 2, %v761
  %v763 = vrot.slane %v671, %v762
  %v764 = vmul.f32 %v763, %v718
  %v765 = vmul.f32 %v763, %v719
  %v766 = vsub.f32 %v671, %v764
  %v767 = vsub.f32 %v672, %v765
  %v768 = vlaneseq
  %v769 = vshrl.u32 %v768, 7
  %v770 = vsub.s32 2, %v769
  %v771 = vrot.slane %v679, %v770
  %v772 = vmul.f32 %v771, %v718
  %v773 = vmul.f32 %v771, %v719
  %v774 = vsub.f32 %v679, %v772
  %v775 = vsub.f32 %v680, %v773
  %v776 = vlaneseq
  %v777 = vshrl.u32 %v776, 7
  %v778 = vsub.s32 2, %v777
  %v779 = vrot.slane %v687, %v778
  %v780 = vmul.f32 %v779, %v718
  %v781 = vmul.f32 %v779, %v719
  %v782 = vsub.f32 %v687, %v780
  %v783 = vsub.f32 %v688, %v781
  %v784 = vlaneseq
  %v785 = vshrl.u32 %v784, 7
  %v786 = vsub.s32 2, %v785
  %v787 = vrot.slane %v695, %v786
  %v788 = vmul.f32 %v787, %v718
  %v789 = vmul.f32 %v787, %v719
  %v790 = vsub.f32 %v695, %v788
  %v791 = vsub.f32 %v696, %v789
  %v792 = vlaneseq
  %v793 = vshrl.u32 %v792, 7
  %v794 = vsub.s32 2, %v793
  %v795 = vrot.slane %v703, %v794
  %v796 = vmul.f32 %v795, %v718
  %v797 = vmul.f32 %v795, %v719
  %v798 = vsub.f32 %v703, %v796
  %v799 = vsub.f32 %v704, %v797
  %v800 = vlaneseq
  %v801 = vshrl.u32 %v800, 7
  %v802 = vsub.s32 2, %v801
  %v803 = vrot.slane %v711, %v802
  %v804 = vmul.f32 %v803, %v718
  %v805 = vmul.f32 %v803, %v719
  %v806 = vsub.f32 %v711, %v804
  %v807 = vsub.f32 %v712, %v805
  %v808 = vrcp.pop %v742
  %v809 = vlaneseq
  %v810 = vshrl.u32 %v809, 7
  %v811 = vsub.s32 3, %v810
  %v812 = vrot.slane %v808, %v811
  %v813 = vmul.f32 %v742, %v812
  %v814 = vmul.f32 %v743, %v812
  %v815 = vlaneseq
  %v816 = vshrl.u32 %v815, 7
  %v817 = vsub.s32 3, %v816
  %v818 = vrot.slane %v726, %v817
  %v819 = vmul.f32 %v818, %v813
  %v820 = vmul.f32 %v818, %v814
  %v821 = vsub.f32 %v726, %v819
  %v822 = vsub.f32 %v727, %v820
  %v823 = vlaneseq
  %v824 = vshrl.u32 %v823, 7
  %v825 = vsub.s32 3, %v824
  %v826 = vrot.slane %v734, %v825
  %v827 = vmul.f32 %v826, %v813
  %v828 = vmul.f32 %v826, %v814
  %v829 = vsub.f32 %v734, %v827
  %v830 = vsub.f32 %v735, %v828
  %v831 = vlaneseq
  %v832 = vshrl.u32 %v831, 7
  %v833 = vsub.s32 3, %v832
  %v834 = vrot.slane %v718, %v833
  %v835 = vmul.f32 %v834, %v813
  %v836 = vmul.f32 %v834, %v814
  %v837 = vsub.f32 %v718, %v835
  %v838 = vsub.f32 %v719, %v836
  %v839 = vlaneseq
  %v840 = vshrl.u32 %v839, 7
  %v841 = vsub.s32 3, %v840
  %v842 = vrot.slane %v750, %v841
  %v843 = vmul.f32 %v842, %v813
  %v844 = vmul.f32 %v842, %v814
  %v845 = vsub.f32 %v750, %v843
  %v846 = vsub.f32 %v751, %v844
  %v847 = vlaneseq
  %v848 = vshrl.u32 %v847, 7
  %v849 = vsub.s32 3, %v848
  %v850 = vrot.slane %v758, %v849
  %v851 = vmul.f32 %v850, %v813
  %v852 = vmul.f32 %v850, %v814
  %v853 = vsub.f32 %v758, %v851
  %v854 = vsub.f32 %v759, %v852
  %v855 = vlaneseq
  %v856 = vshrl.u32 %v855, 7
  %v857 = vsub.s32 3, %v856
  %v858 = vrot.slane %v766, %v857
  %v859 = vmul.f32 %v858, %v813
  %v860 = vmul.f32 %v858, %v814
  %v861 = vsub.f32 %v766, %v859
  %v862 = vsub.f32 %v767, %v860
  %v863 = vlaneseq
  %v864 = vshrl.u32 %v863, 7
  %v865 = vsub.s32 3, %v864
  %v866 = vrot.slane %v774, %v865
  %v867 = vmul.f32 %v866, %v813
  %v868 = vmul.f32 %v866, %v814
  %v869 = vsub.f32 %v774, %v867
  %v870 = vsub.f32 %v775, %v868
  %v871 = vlaneseq
  %v872 = vshrl.u32 %v871, 7
  %v873 = vsub.s32 3, %v872
  %v874 = vrot.slane %v782, %v873
  %v875 = vmul.f32 %v874, %v813
  %v876 = vmul.f32 %v874, %v814
  %v877 = vsub.f32 %v782, %v875
  %v878 = vsub.f32 %v783, %v876
  %v879 = vlaneseq
  %v880 = vshrl.u32 %v879, 7
  %v881 = vsub.s32 3, %v880
  %v882 = vrot.slane %v790, %v881
  %v883 = vmul.f32 %v882, %v813
  %v884 = vmul.f32 %v882, %v814
  %v885 = vsub.f32 %v790, %v883
  %v886 = vsub.f32 %v791, %v884
  %v887 = vlaneseq
  %v888 = vshrl.u32 %v887, 7
  %v889 = vsub.s32 3, %v888
  %v890 = vrot.slane %v798, %v889
  %v891 = vmul.f32 %v890, %v813
  %v892 = vmul.f32 %v890, %v814
  %v893 = vsub.f32 %v798, %v891
  %v894 = vsub.f32 %v799, %v892
  %v895 = vlaneseq
  %v896 = vshrl.u32 %v895, 7
  %v897 = vsub.s32 3, %v896
  %v898 = vrot.slane %v806, %v897
  %v899 = vmul.f32 %v898, %v813
  %v900 = vmul.f32 %v898, %v814
  %v901 = vsub.f32 %v806, %v899
  %v902 = vsub.f32 %v807, %v900
  %v903 = vrcp.pop %v845
  %v904 = vlaneseq
  %v905 = vshrl.u32 %v904, 7
  %v906 = vsub.s32 4, %v905
  %v907 = vrot.slane %v903, %v906
  %v908 = vmul.f32 %v845, %v907
  %v909 = vmul.f32 %v846, %v907
  %v910 = vlaneseq
  %v911 = vshrl.u32 %v910, 7
  %v912 = vsub.s32 4, %v911
  %v913 = vrot.slane %v821, %v912
  %v914 = vmul.f32 %v913, %v908
  %v915 = vmul.f32 %v913, %v909
  %v916 = vsub.f32 %v821, %v914
  %v917 = vsub.f32 %v822, %v915
  %v918 = vlaneseq
  %v919 = vshrl.u32 %v918, 7
  %v920 = vsub.s32 4, %v919
  %v921 = vrot.slane %v829, %v920
  %v922 = vmul.f32 %v921, %v908
  %v923 = vmul.f32 %v921, %v909
  %v924 = vsub.f32 %v829, %v922
  %v925 = vsub.f32 %v830, %v923
  %v926 = vlaneseq
  %v927 = vshrl.u32 %v926, 7
  %v928 = vsub.s32 4, %v927
  %v929 = vrot.slane %v837, %v928
  %v930 = vmul.f32 %v929, %v908
  %v931 = vmul.f32 %v929, %v909
  %v932 = vsub.f32 %v837, %v930
  %v933 = vsub.f32 %v838, %v931
  %v934 = vlaneseq
  %v935 = vshrl.u32 %v934, 7
  %v936 = vsub.s32 4, %v935
  %v937 = vrot.slane %v813, %v936
  %v938 = vmul.f32 %v937, %v908
  %v939 = vmul.f32 %v937, %v909
  %v940 = vsub.f32 %v813, %v938
  %v941 = vsub.f32 %v814, %v939
  %v942 = vlaneseq
  %v943 = vshrl.u32 %v942, 7
  %v944 = vsub.s32 4, %v943
  %v945 = vrot.slane %v853, %v944
  %v946 = vmul.f32 %v945, %v908
  %v947 = vmul.f32 %v945, %v909
  %v948 = vsub.f32 %v853, %v946
  %v949 = vsub.f32 %v854, %v947
  %v950 = vlaneseq
  %v951 = vshrl.u32 %v950, 7
  %v952 = vsub.s32 4, %v951
  %v953 = vrot.slane %v861, %v952
  %v954 = vmul.f32 %v953, %v908
  %v955 = vmul.f32 %v953, %v909
  %v956 = vsub.f32 %v861, %v954
  %v957 = vsub.f32 %v862, %v955
  %v958 = vlaneseq
  %v959 = vshrl.u32 %v958, 7
  %v960 = vsub.s32 4, %v959
  %v961 = vrot.slane %v869, %v960
  %v962 = vmul.f32 %v961, %v908
  %v963 = vmul.f32 %v961, %v909
  %v964 = vsub.f32 %v869, %v962
  %v965 = vsub.f32 %v870, %v963
  %v966 = vlaneseq
  %v967 = vshrl.u32 %v966, 7
  %v968 = vsub.s32 4, %v967
  %v969 = vrot.slane %v877, %v968
  %v970 = vmul.f32 %v969, %v908
  %v971 = vmul.f32 %v969, %v909
  %v972 = vsub.f32 %v877, %v970
  %v973 = vsub.f32 %v878, %v971
  %v974 = vlaneseq
  %v975 = vshrl.u32 %v974, 7
  %v976 = vsub.s32 4, %v975
  %v977 = vrot.slane %v885, %v976
  %v978 = vmul.f32 %v977, %v908
  %v979 = vmul.f32 %v977, %v909
  %v980 = vsub.f32 %v885, %v978
  %v981 = vsub.f32 %v886, %v979
  %v982 = vlaneseq
  %v983 = vshrl.u32 %v982, 7
  %v984 = vsub.s32 4, %v983
  %v985 = vrot.slane %v893, %v984
  %v986 = vmul.f32 %v985, %v908
  %v987 = vmul.f32 %v985, %v909
  %v988 = vsub.f32 %v893, %v986
  %v989 = vsub.f32 %v894, %v987
  %v990 = vlaneseq
  %v991 = vshrl.u32 %v990, 7
  %v992 = vsub.s32 4, %v991
  %v993 = vrot.slane %v901, %v992
  %v994 = vmul.f32 %v993, %v908
  %v995 = vmul.f32 %v993, %v909
  %v996 = vsub.f32 %v901, %v994
  %v997 = vsub.f32 %v902, %v995
  %v998 = vrcp.pop %v948
  %v999 = vlaneseq
  %v1000 = vshrl.u32 %v999, 7
  %v1001 = vsub.s32 5, %v1000
  %v1002 = vrot.slane %v998, %v1001
  %v1003 = vmul.f32 %v948, %v1002
  %v1004 = vmul.f32 %v949, %v1002
  %v1005 = vlaneseq
  %v1006 = vshrl.u32 %v1005, 7
  %v1007 = vsub.s32 5, %v1006
  %v1008 = vrot.slane %v916, %v1007
  %v1009 = vmul.f32 %v1008, %v1003
  %v1010 = vmul.f32 %v1008, %v1004
  %v1011 = vsub.f32 %v916, %v1009
  %v1012 = vsub.f32 %v917, %v1010
  %v1013 = vlaneseq
  %v1014 = vshrl.u32 %v1013, 7
  %v1015 = vsub.s32 5, %v1014
  %v1016 = vrot.slane %v924, %v1015
  %v1017 = vmul.f32 %v1016, %v1003
  %v1018 = vmul.f32 %v1016, %v1004
  %v1019 = vsub.f32 %v924, %v1017
  %v1020 = vsub.f32 %v925, %v1018
  %v1021 = vlaneseq
  %v1022 = vshrl.u32 %v1021, 7
  %v1023 = vsub.s32 5, %v1022
  %v1024 = vrot.slane %v932, %v1023
  %v1025 = vmul.f32 %v1024, %v1003
  %v1026 = vmul.f32 %v1024, %v1004
  %v1027 = vsub.f32 %v932, %v1025
  %v1028 = vsub.f32 %v933, %v1026
  %v1029 = vlaneseq
  %v1030 = vshrl.u32 %v1029, 7
  %v1031 = vsub.s32 5, %v1030
  %v1032 = vrot.slane %v940, %v1031
  %v1033 = vmul.f32 %v1032, %v1003
  %v1034 = vmul.f32 %v1032, %v1004
  %v1035 = vsub.f32 %v940, %v1033
  %v1036 = vsub.f32 %v941, %v1034
  %v1037 = vlaneseq
  %v1038 = vshrl.u32 %v1037, 7
  %v1039 = vsub.s32 5, %v1038
  %v1040 = vrot.slane %v908, %v1039
  %v1041 = vmul.f32 %v1040, %v1003
  %v1042 = vmul.f32 %v1040, %v1004
  %v1043 = vsub.f32 %v908, %v1041
  %v1044 = vsub.f32 %v909, %v1042
  %v1045 = vlaneseq
  %v1046 = vshrl.u32 %v1045, 7
  %v1047 = vsub.s32 5, %v1046
  %v1048 = vrot.slane %v956, %v1047
  %v1049 = vmul.f32 %v1048, %v1003
  %v1050 = vmul.f32 %v1048, %v1004
  %v1051 = vsub.f32 %v956, %v1049
  %v1052 = vsub.f32 %v957, %v1050
  %v1053 = vlaneseq
  %v1054 = vshrl.u32 %v1053, 7
  %v1055 = vsub.s32 5, %v1054
  %v1056 = vrot.slane %v964, %v1055
  %v1057 = vmul.f32 %v1056, %v1003
  %v1058 = vmul.f32 %v1056, %v1004
  %v1059 = vsub.f32 %v964, %v1057
  %v1060 = vsub.f32 %v965, %v1058
  %v1061 = vlaneseq
  %v1062 = vshrl.u32 %v1061, 7
  %v1063 = vsub.s32 5, %v1062
  %v1064 = vrot.slane %v972, %v1063
  %v1065 = vmul.f32 %v1064, %v1003
  %v1066 = vmul.f32 %v1064, %v1004
  %v1067 = vsub.f32 %v972, %v1065
  %v1068 = vsub.f32 %v973, %v1066
  %v1069 = vlaneseq
  %v1070 = vshrl.u32 %v1069, 7
  %v1071 = vsub.s32 5, %v1070
  %v1072 = vrot.slane %v980, %v1071
  %v1073 = vmul.f32 %v1072, %v1003
  %v1074 = vmul.f32 %v1072, %v1004
  %v1075 = vsub.f32 %v980, %v1073
  %v1076 = vsub.f32 %v981, %v1074
  %v1077 = vlaneseq
  %v1078 = vshrl.u32 %v1077, 7
  %v1079 = vsub.s32 5, %v1078
  %v1080 = vrot.slane %v988, %v1079
  %v1081 = vmul.f32 %v1080, %v1003
  %v1082 = vmul.f32 %v1080, %v1004
  %v1083 = vsub.f32 %v988, %v1081
  %v1084 = vsub.f32 %v989, %v1082
  %v1085 = vlaneseq
  %v1086 = vshrl.u32 %v1085, 7
  %v1087 = vsub.s32 5, %v1086
  %v1088 = vrot.slane %v996, %v1087
  %v1089 = vmul.f32 %v1088, %v1003
  %v1090 = vmul.f32 %v1088, %v1004
  %v1091 = vsub.f32 %v996, %v1089
  %v1092 = vsub.f32 %v997, %v1090
  %v1093 = vrcp.pop %v1051
  %v1094 = vlaneseq
  %v1095 = vshrl.u32 %v1094, 7
  %v1096 = vsub.s32 6, %v1095
  %v1097 = vrot.slane %v1093, %v1096
  %v1098 = vmul.f32 %v1051, %v1097
  %v1099 = vmul.f32 %v1052, %v1097
  %v1100 = vlaneseq
  %v1101 = vshrl.u32 %v1100, 7
  %v1102 = vsub.s32 6, %v1101
  %v1103 = vrot.slane %v1011, %v1102
  %v1104 = vmul.f32 %v1103, %v1098
  %v1105 = vmul.f32 %v1103, %v1099
  %v1106 = vsub.f32 %v1011, %v1104
  %v1107 = vsub.f32 %v1012, %v1105
  %v1108 = vlaneseq
  %v1109 = vshrl.u32 %v1108, 7
  %v1110 = vsub.s32 6, %v1109
  %v1111 = vrot.slane %v1019, %v1110
  %v1112 = vmul.f32 %v1111, %v1098
  %v1113 = vmul.f32 %v1111, %v1099
  %v1114 = vsub.f32 %v1019, %v1112
  %v1115 = vsub.f32 %v1020, %v1113
  %v1116 = vlaneseq
  %v1117 = vshrl.u32 %v1116, 7
  %v1118 = vsub.s32 6, %v1117
  %v1119 = vrot.slane %v1027, %v1118
  %v1120 = vmul.f32 %v1119, %v1098
  %v1121 = vmul.f32 %v1119, %v1099
  %v1122 = vsub.f32 %v1027, %v1120
  %v1123 = vsub.f32 %v1028, %v1121
  %v1124 = vlaneseq
  %v1125 = vshrl.u32 %v1124, 7
  %v1126 = vsub.s32 6, %v1125
  %v1127 = vrot.slane %v1035, %v1126
  %v1128 = vmul.f32 %v1127, %v1098
  %v1129 = vmul.f32 %v1127, %v1099
  %v1130 = vsub.f32 %v1035, %v1128
  %v1131 = vsub.f32 %v1036, %v1129
  %v1132 = vlaneseq
  %v1133 = vshrl.u32 %v1132, 7
  %v1134 = vsub.s32 6, %v1133
  %v1135 = vrot.slane %v1043, %v1134
  %v1136 = vmul.f32 %v1135, %v1098
  %v1137 = vmul.f32 %v1135, %v1099
  %v1138 = vsub.f32 %v1043, %v1136
  %v1139 = vsub.f32 %v1044, %v1137
  %v1140 = vlaneseq
  %v1141 = vshrl.u32 %v1140, 7
  %v1142 = vsub.s32 6, %v1141
  %v1143 = vrot.slane %v1003, %v1142
  %v1144 = vmul.f32 %v1143, %v1098
  %v1145 = vmul.f32 %v1143, %v1099
  %v1146 = vsub.f32 %v1003, %v1144
  %v1147 = vsub.f32 %v1004, %v1145
  %v1148 = vlaneseq
  %v1149 = vshrl.u32 %v1148, 7
  %v1150 = vsub.s32 6, %v1149
  %v1151 = vrot.slane %v1059, %v1150
  %v1152 = vmul.f32 %v1151, %v1098
  %v1153 = vmul.f32 %v1151, %v1099
  %v1154 = vsub.f32 %v1059, %v1152
  %v1155 = vsub.f32 %v1060, %v1153
  %v1156 = vlaneseq
  %v1157 = vshrl.u32 %v1156, 7
  %v1158 = vsub.s32 6, %v1157
  %v1159 = vrot.slane %v1067, %v1158
  %v1160 = vmul.f32 %v1159, %v1098
  %v1161 = vmul.f32 %v1159, %v1099
  %v1162 = vsub.f32 %v1067, %v1160
  %v1163 = vsub.f32 %v1068, %v1161
  %v1164 = vlaneseq
  %v1165 = vshrl.u32 %v1164, 7
  %v1166 = vsub.s32 6, %v1165
  %v1167 = vrot.slane %v1075, %v1166
  %v1168 = vmul.f32 %v1167, %v1098
  %v1169 = vmul.f32 %v1167, %v1099
  %v1170 = vsub.f32 %v1075, %v1168
  %v1171 = vsub.f32 %v1076, %v1169
  %v1172 = vlaneseq
  %v1173 = vshrl.u32 %v1172, 7
  %v1174 = vsub.s32 6, %v1173
  %v1175 = vrot.slane %v1083, %v1174
  %v1176 = vmul.f32 %v1175, %v1098
  %v1177 = vmul.f32 %v1175, %v1099
  %v1178 = vsub.f32 %v1083, %v1176
  %v1179 = vsub.f32 %v1084, %v1177
  %v1180 = vlaneseq
  %v1181 = vshrl.u32 %v1180, 7
  %v1182 = vsub.s32 6, %v1181
  %v1183 = vrot.slane %v1091, %v1182
  %v1184 = vmul.f32 %v1183, %v1098
  %v1185 = vmul.f32 %v1183, %v1099
  %v1186 = vsub.f32 %v1091, %v1184
  %v1187 = vsub.f32 %v1092, %v1185
  %v1188 = vrcp.pop %v1154
  %v1189 = vlaneseq
  %v1190 = vshrl.u32 %v1189, 7
  %v1191 = vsub.s32 7, %v1190
  %v1192 = vrot.slane %v1188, %v1191
  %v1193 = vmul.f32 %v1155, %v1192
  %v1194 = vlaneseq
  %v1195 = vshrl.u32 %v1194, 7
  %v1196 = vsub.s32 7, %v1195
  %v1197 = vrot.slane %v1106, %v1196
  %v1198 = vmul.f32 %v1197, %v1193
  %v1199 = vsub.f32 %v1107, %v1198
  %v1200 = vlaneseq
  %v1201 = vshrl.u32 %v1200, 7
  %v1202 = vsub.s32 7, %v1201
  %v1203 = vrot.slane %v1114, %v1202
  %v1204 = vmul.f32 %v1203, %v1193
  %v1205 = vsub.f32 %v1115, %v1204
  %v1206 = vlaneseq
  %v1207 = vshrl.u32 %v1206, 7
  %v1208 = vsub.s32 7, %v1207
  %v1209 = vrot.slane %v1122, %v1208
  %v1210 = vmul.f32 %v1209, %v1193
  %v1211 = vsub.f32 %v1123, %v1210
  %v1212 = vlaneseq
  %v1213 = vshrl.u32 %v1212, 7
  %v1214 = vsub.s32 7, %v1213
  %v1215 = vrot.slane %v1130, %v1214
  %v1216 = vmul.f32 %v1215, %v1193
  %v1217 = vsub.f32 %v1131, %v1216
  %v1218 = vlaneseq
  %v1219 = vshrl.u32 %v1218, 7
  %v1220 = vsub.s32 7, %v1219
  %v1221 = vrot.slane %v1138, %v1220
  %v1222 = vmul.f32 %v1221, %v1193
  %v1223 = vsub.f32 %v1139, %v1222
  %v1224 = vlaneseq
  %v1225 = vshrl.u32 %v1224, 7
  %v1226 = vsub.s32 7, %v1225
  %v1227 = vrot.slane %v1146, %v1226
  %v1228 = vmul.f32 %v1227, %v1193
  %v1229 = vsub.f32 %v1147, %v1228
  %v1230 = vlaneseq
  %v1231 = vshrl.u32 %v1230, 7
  %v1232 = vsub.s32 7, %v1231
  %v1233 = vrot.slane %v1098, %v1232
  %v1234 = vmul.f32 %v1233, %v1193
  %v1235 = vsub.f32 %v1099, %v1234
  %v1236 = vlaneseq
  %v1237 = vshrl.u32 %v1236, 7
  %v1238 = vsub.s32 7, %v1237
  %v1239 = vrot.slane %v1162, %v1238
  %v1240 = vmul.f32 %v1239, %v1193
  %v1241 = vsub.f32 %v1163, %v1240
  %v1242 = vlaneseq
  %v1243 = vshrl.u32 %v1242, 7
  %v1244 = vsub.s32 7, %v1243
  %v1245 = vrot.slane %v1170, %v1244
  %v1246 = vmul.f32 %v1245, %v1193
  %v1247 = vsub.f32 %v1171, %v1246
  %v1248 = vlaneseq
  %v1249 = vshrl.u32 %v1248, 7
  %v1250 = vsub.s32 7, %v1249
  %v1251 = vrot.slane %v1178, %v1250
  %v1252 = vmul.f32 %v1251, %v1193
  %v1253 = vsub.f32 %v1179, %v1252
  %v1254 = vlaneseq
  %v1255 = vshrl.u32 %v1254, 7
  %v1256 = vsub.s32 7, %v1255
  %v1257 = vrot.slane %v1186, %v1256
  %v1258 = vmul.f32 %v1257, %v1193
  %v1259 = vsub.f32 %v1187, %v1258
  %v1260 = vrcp.pop %v1241
  %v1261 = vlaneseq
  %v1262 = vshrl.u32 %v1261, 7
  %v1263 = vsub.s32 0, %v1262
  %v1264 = vrot.slane %v1260, %v1263
  %v1265 = vmul.f32 %v1241, %v1264
  %v1266 = vlaneseq
  %v1267 = vshrl.u32 %v1266, 7
  %v1268 = vsub.s32 0, %v1267
  %v1269 = vrot.slane %v1199, %v1268
  %v1270 = vmul.f32 %v1269, %v1265
  %v1271 = vsub.f32 %v1199, %v1270
  %v1272 = vlaneseq
  %v1273 = vshrl.u32 %v1272, 7
  %v1274 = vsub.s32 0, %v1273
  %v1275 = vrot.slane %v1205, %v1274
  %v1276 = vmul.f32 %v1275, %v1265
  %v1277 = vsub.f32 %v1205, %v1276
  %v1278 = vlaneseq
  %v1279 = vshrl.u32 %v1278, 7
  %v1280 = vsub.s32 0, %v1279
  %v1281 = vrot.slane %v1211, %v1280
  %v1282 = vmul.f32 %v1281, %v1265
  %v1283 = vsub.f32 %v1211, %v1282
  %v1284 = vlaneseq
  %v1285 = vshrl.u32 %v1284, 7
  %v1286 = vsub.s32 0, %v1285
  %v1287 = vrot.slane %v1217, %v1286
  %v1288 = vmul.f32 %v1287, %v1265
  %v1289 = vsub.f32 %v1217, %v1288
  %v1290 = vlaneseq
  %v1291 = vshrl.u32 %v1290, 7
  %v1292 = vsub.s32 0, %v1291
  %v1293 = vrot.slane %v1223, %v1292
  %v1294 = vmul.f32 %v1293, %v1265
  %v1295 = vsub.f32 %v1223, %v1294
  %v1296 = vlaneseq
  %v1297 = vshrl.u32 %v1296, 7
  %v1298 = vsub.s32 0, %v1297
  %v1299 = vrot.slane %v1229, %v1298
  %v1300 = vmul.f32 %v1299, %v1265
  %v1301 = vsub.f32 %v1229, %v1300
  %v1302 = vlaneseq
  %v1303 = vshrl.u32 %v1302, 7
  %v1304 = vsub.s32 0, %v1303
  %v1305 = vrot.slane %v1235, %v1304
  %v1306 = vmul.f32 %v1305, %v1265
  %v1307 = vsub.f32 %v1235, %v1306
  %v1308 = vlaneseq
  %v1309 = vshrl.u32 %v1308, 7
  %v1310 = vsub.s32 0, %v1309
  %v1311 = vrot.slane %v1193, %v1310
  %v1312 = vmul.f32 %v1311, %v1265
  %v1313 = vsub.f32 %v1193, %v1312
  %v1314 = vlaneseq
  %v1315 = vshrl.u32 %v1314, 7
  %v1316 = vsub.s32 0, %v1315
  %v1317 = vrot.slane %v1247, %v1316
  %v1318 = vmul.f32 %v1317, %v1265
  %v1319 = vsub.f32 %v1247, %v1318
  %v1320 = vlaneseq
  %v1321 = vshrl.u32 %v1320, 7
  %v1322 = vsub.s32 0, %v1321
  %v1323 = vrot.slane %v1253, %v1322
  %v1324 = vmul.f32 %v1323, %v1265
  %v1325 = vsub.f32 %v1253, %v1324
  %v1326 = vlaneseq
  %v1327 = vshrl.u32 %v1326, 7
  %v1328 = vsub.s32 0, %v1327
  %v1329 = vrot.slane %v1259, %v1328
  %v1330 = vmul.f32 %v1329, %v1265
  %v1331 = vsub.f32 %v1259, %v1330
  %v1332 = vrcp.pop %v1319
  %v1333 = vlaneseq
  %v1334 = vshrl.u32 %v1333, 7
  %v1335 = vsub.s32 1, %v1334
  %v1336 = vrot.slane %v1332, %v1335
  %v1337 = vmul.f32 %v1319, %v1336
  %v1338 = vlaneseq
  %v1339 = vshrl.u32 %v1338, 7
  %v1340 = vsub.s32 1, %v1339
  %v1341 = vrot.slane %v1271, %v1340
  %v1342 = vmul.f32 %v1341, %v1337
  %v1343 = vsub.f32 %v1271, %v1342
  %v1344 = vlaneseq
  %v1345 = vshrl.u32 %v1344, 7
  %v1346 = vsub.s32 1, %v1345
  %v1347 = vrot.slane %v1277, %v1346
  %v1348 = vmul.f32 %v1347, %v1337
  %v1349 = vsub.f32 %v1277, %v1348
  %v1350 = vlaneseq
  %v1351 = vshrl.u32 %v1350, 7
  %v1352 = vsub.s32 1, %v1351
  %v1353 = vrot.slane %v1283, %v1352
  %v1354 = vmul.f32 %v1353, %v1337
  %v1355 = vsub.f32 %v1283, %v1354
  %v1356 = vlaneseq
  %v1357 = vshrl.u32 %v1356, 7
  %v1358 = vsub.s32 1, %v1357
  %v1359 = vrot.slane %v1289, %v1358
  %v1360 = vmul.f32 %v1359, %v1337
  %v1361 = vsub.f32 %v1289, %v1360
  %v1362 = vlaneseq
  %v1363 = vshrl.u32 %v1362, 7
  %v1364 = vsub.s32 1, %v1363
  %v1365 = vrot.slane %v1295, %v1364
  %v1366 = vmul.f32 %v1365, %v1337
  %v1367 = vsub.f32 %v1295, %v1366
  %v1368 = vlaneseq
  %v1369 = vshrl.u32 %v1368, 7
  %v1370 = vsub.s32 1, %v1369
  %v1371 = vrot.slane %v1301, %v1370
  %v1372 = vmul.f32 %v1371, %v1337
  %v1373 = vsub.f32 %v1301, %v1372
  %v1374 = vlaneseq
  %v1375 = vshrl.u32 %v1374, 7
  %v1376 = vsub.s32 1, %v1375
  %v1377 = vrot.slane %v1307, %v1376
  %v1378 = vmul.f32 %v1377, %v1337
  %v1379 = vsub.f32 %v1307, %v1378
  %v1380 = vlaneseq
  %v1381 = vshrl.u32 %v1380, 7
  %v1382 = vsub.s32 1, %v1381
  %v1383 = vrot.slane %v1313, %v1382
  %v1384 = vmul.f32 %v1383, %v1337
  %v1385 = vsub.f32 %v1313, %v1384
  %v1386 = vlaneseq
  %v1387 = vshrl.u32 %v1386, 7
  %v1388 = vsub.s32 1, %v1387
  %v1389 = vrot.slane %v1265, %v1388
  %v1390 = vmul.f32 %v1389, %v1337
  %v1391 = vsub.f32 %v1265, %v1390
  %v1392 = vlaneseq
  %v1393 = vshrl.u32 %v1392, 7
  %v1394 = vsub.s32 1, %v1393
  %v1395 = vrot.slane %v1325, %v1394
  %v1396 = vmul.f32 %v1395, %v1337
  %v1397 = vsub.f32 %v1325, %v1396
  %v1398 = vlaneseq
  %v1399 = vshrl.u32 %v1398, 7
  %v1400 = vsub.s32 1, %v1399
  %v1401 = vrot.slane %v1331, %v1400
  %v1402 = vmul.f32 %v1401, %v1337
  %v1403 = vsub.f32 %v1331, %v1402
  %v1404 = vrcp.pop %v1397
  %v1405 = vlaneseq
  %v1406 = vshrl.u32 %v1405, 7
  %v1407 = vsub.s32 2, %v1406
  %v1408 = vrot.slane %v1404, %v1407
  %v1409 = vmul.f32 %v1397, %v1408
  %v1410 = vlaneseq
  %v1411 = vshrl.u32 %v1410, 7
  %v1412 = vsub.s32 2, %v1411
  %v1413 = vrot.slane %v1343, %v1412
  %v1414 = vmul.f32 %v1413, %v1409
  %v1415 = vsub.f32 %v1343, %v1414
  %v1416 = vlaneseq
  %v1417 = vshrl.u32 %v1416, 7
  %v1418 = vsub.s32 2, %v1417
  %v1419 = vrot.slane %v1349, %v1418
  %v1420 = vmul.f32 %v1419, %v1409
  %v1421 = vsub.f32 %v1349, %v1420
  %v1422 = vlaneseq
  %v1423 = vshrl.u32 %v1422, 7
  %v1424 = vsub.s32 2, %v1423
  %v1425 = vrot.slane %v1355, %v1424
  %v1426 = vmul.f32 %v1425, %v1409
  %v1427 = vsub.f32 %v1355, %v1426
  %v1428 = vlaneseq
  %v1429 = vshrl.u32 %v1428, 7
  %v1430 = vsub.s32 2, %v1429
  %v1431 = vrot.slane %v1361, %v1430
  %v1432 = vmul.f32 %v1431, %v1409
  %v1433 = vsub.f32 %v1361, %v1432
  %v1434 = vlaneseq
  %v1435 = vshrl.u32 %v1434, 7
  %v1436 = vsub.s32 2, %v1435
  %v1437 = vrot.slane %v1367, %v1436
  %v1438 = vmul.f32 %v1437, %v1409
  %v1439 = vsub.f32 %v1367, %v1438
  %v1440 = vlaneseq
  %v1441 = vshrl.u32 %v1440, 7
  %v1442 = vsub.s32 2, %v1441
  %v1443 = vrot.slane %v1373, %v1442
  %v1444 = vmul.f32 %v1443, %v1409
  %v1445 = vsub.f32 %v1373, %v1444
  %v1446 = vlaneseq
  %v1447 = vshrl.u32 %v1446, 7
  %v1448 = vsub.s32 2, %v1447
  %v1449 = vrot.slane %v1379, %v1448
  %v1450 = vmul.f32 %v1449, %v1409
  %v1451 = vsub.f32 %v1379, %v1450
  %v1452 = vlaneseq
  %v1453 = vshrl.u32 %v1452, 7
  %v1454 = vsub.s32 2, %v1453
  %v1455 = vrot.slane %v1385, %v1454
  %v1456 = vmul.f32 %v1455, %v1409
  %v1457 = vsub.f32 %v1385, %v1456
  %v1458 = vlaneseq
  %v1459 = vshrl.u32 %v1458, 7
  %v1460 = vsub.s32 2, %v1459
  %v1461 = vrot.slane %v1391, %v1460
  %v1462 = vmul.f32 %v1461, %v1409
  %v1463 = vsub.f32 %v1391, %v1462
  %v1464 = vlaneseq
  %v1465 = vshrl.u32 %v1464, 7
  %v1466 = vsub.s32 2, %v1465
  %v1467 = vrot.slane %v1337, %v1466
  %v1468 = vmul.f32 %v1467, %v1409
  %v1469 = vsub.f32 %v1337, %v1468
  %v1470 = vlaneseq
  %v1471 = vshrl.u32 %v1470, 7
  %v1472 = vsub.s32 2, %v1471
  %v1473 = vrot.slane %v1403, %v1472
  %v1474 = vmul.f32 %v1473, %v1409
  %v1475 = vsub.f32 %v1403, %v1474
  %v1476 = vrcp.pop %v1475
  %v1477 = vlaneseq
  %v1478 = vshrl.u32 %v1477, 7
  %v1479 = vsub.s32 3, %v1478
  %v1480 = vrot.slane %v1476, %v1479
  %v1481 = vmul.f32 %v1475, %v1480
  %v1482 = vlaneseq
  %v1483 = vshrl.u32 %v1482, 7
  %v1484 = vsub.s32 3, %v1483
  %v1485 = vrot.slane %v1415, %v1484
  %v1486 = vmul.f32 %v1485, %v1481
  %v1487 = vsub.f32 %v1415, %v1486
  %v1488 = vlaneseq
  %v1489 = vshrl.u32 %v1488, 7
  %v1490 = vsub.s32 3, %v1489
  %v1491 = vrot.slane %v1421, %v1490
  %v1492 = vmul.f32 %v1491, %v1481
  %v1493 = vsub.f32 %v1421, %v1492
  %v1494 = vlaneseq
  %v1495 = vshrl.u32 %v1494, 7
  %v1496 = vsub.s32 3, %v1495
  %v1497 = vrot.slane %v1427, %v1496
  %v1498 = vmul.f32 %v1497, %v1481
  %v1499 = vsub.f32 %v1427, %v1498
  %v1500 = vlaneseq
  %v1501 = vshrl.u32 %v1500, 7
  %v1502 = vsub.s32 3, %v1501
  %v1503 = vrot.slane %v1433, %v1502
  %v1504 = vmul.f32 %v1503, %v1481
  %v1505 = vsub.f32 %v1433, %v1504
  %v1506 = vlaneseq
  %v1507 = vshrl.u32 %v1506, 7
  %v1508 = vsub.s32 3, %v1507
  %v1509 = vrot.slane %v1439, %v1508
  %v1510 = vmul.f32 %v1509, %v1481
  %v1511 = vsub.f32 %v1439, %v1510
  %v1512 = vlaneseq
  %v1513 = vshrl.u32 %v1512, 7
  %v1514 = vsub.s32 3, %v1513
  %v1515 = vrot.slane %v1445, %v1514
  %v1516 = vmul.f32 %v1515, %v1481
  %v1517 = vsub.f32 %v1445, %v1516
  %v1518 = vlaneseq
  %v1519 = vshrl.u32 %v1518, 7
  %v1520 = vsub.s32 3, %v1519
  %v1521 = vrot.slane %v1451, %v1520
  %v1522 = vmul.f32 %v1521, %v1481
  %v1523 = vsub.f32 %v1451, %v1522
  %v1524 = vlaneseq
  %v1525 = vshrl.u32 %v1524, 7
  %v1526 = vsub.s32 3, %v1525
  %v1527 = vrot.slane %v1457, %v1526
  %v1528 = vmul.f32 %v1527, %v1481
  %v1529 = vsub.f32 %v1457, %v1528
  %v1530 = vlaneseq
  %v1531 = vshrl.u32 %v1530, 7
  %v1532 = vsub.s32 3, %v1531
  %v1533 = vrot.slane %v1463, %v1532
  %v1534 = vmul.f32 %v1533, %v1481
  %v1535 = vsub.f32 %v1463, %v1534
  %v1536 = vlaneseq
  %v1537 = vshrl.u32 %v1536, 7
  %v1538 = vsub.s32 3, %v1537
  %v1539 = vrot.slane %v1469, %v1538
  %v1540 = vmul.f32 %v1539, %v1481
  %v1541 = vsub.f32 %v1469, %v1540
  %v1542 = vlaneseq
  %v1543 = vshrl.u32 %v1542, 7
  %v1544 = vsub.s32 3, %v1543
  %v1545 = vrot.slane %v1409, %v1544
  %v1546 = vmul.f32 %v1545, %v1481
  %v1547 = vsub.f32 %v1409, %v1546
  %v1549 = vrot.slane %v1487, 4
  %v1552 = vrot.slane %v1493, 3
  %v1555 = vrot.slane %v1499, 2
  %v1558 = vrot.slane %v1505, 1
  %v1561 = vrot.slane %v1517, 7
  %v1564 = vrot.slane %v1523, 6
  %v1567 = vrot.slane %v1529, 5
  %v1569 = vsel %vm411, %v1549, %v1552
  %v1570 = vsel %vm413, %v1569, %v1555
  %v1571 = vsel %vm415, %v1570, %v1558
  %v1572 = vsel %vm417, %v1571, %v1511
  %vm1573 = vcmask 1044480
  %v1574 = vsel %vm1573, %v1572, %v1561
  %vm1575 = vcmask 1045504
  %v1576 = vsel %vm1575, %v1574, %v1564
  %vm1577 = vcmask 1046528
  %v1578 = vsel %vm1577, %v1576, %v1567
  %v1579 = vlaneseq
  %v1580 = vshrl.u32 %v1579, 7
  %v1581 = vsub.s32 4, %v1580
  %v1582 = vrot.slane %v1487, %v1581
  %v1583 = vmul.f32 %v68, %v1582
  %v1584 = vlaneseq
  %v1585 = vshrl.u32 %v1584, 7
  %v1586 = vsub.s32 4, %v1585
  %v1587 = vrot.slane %v1493, %v1586
  %v1588 = vmul.f32 %v115, %v1587
  %v1589 = vadd.f32 %v1583, %v1588
  %v1590 = vlaneseq
  %v1591 = vshrl.u32 %v1590, 7
  %v1592 = vsub.s32 4, %v1591
  %v1593 = vrot.slane %v1499, %v1592
  %v1594 = vmul.f32 %v162, %v1593
  %v1595 = vadd.f32 %v1589, %v1594
  %v1596 = vlaneseq
  %v1597 = vshrl.u32 %v1596, 7
  %v1598 = vsub.s32 4, %v1597
  %v1599 = vrot.slane %v1505, %v1598
  %v1600 = vmul.f32 %v209, %v1599
  %v1601 = vadd.f32 %v1595, %v1600
  %v1602 = vlaneseq
  %v1603 = vshrl.u32 %v1602, 7
  %v1604 = vsub.s32 4, %v1603
  %v1605 = vrot.slane %v1511, %v1604
  %v1606 = vmul.f32 %v256, %v1605
  %v1607 = vadd.f32 %v1601, %v1606
  %v1608 = vlaneseq
  %v1609 = vshrl.u32 %v1608, 7
  %v1610 = vsub.s32 4, %v1609
  %v1611 = vrot.slane %v1517, %v1610
  %v1612 = vmul.f32 %v303, %v1611
  %v1613 = vadd.f32 %v1607, %v1612
  %v1614 = vlaneseq
  %v1615 = vshrl.u32 %v1614, 7
  %v1616 = vsub.s32 4, %v1615
  %v1617 = vrot.slane %v1523, %v1616
  %v1618 = vmul.f32 %v350, %v1617
  %v1619 = vadd.f32 %v1613, %v1618
  %v1620 = vlaneseq
  %v1621 = vshrl.u32 %v1620, 7
  %v1622 = vsub.s32 4, %v1621
  %v1623 = vrot.slane %v1529, %v1622
  %v1624 = vmul.f32 %v397, %v1623
  %v1625 = vadd.f32 %v1619, %v1624
  %v1626 = vlaneseq
  %v1627 = vshrl.u32 %v1626, 7
  %v1628 = vsub.s32 4, %v1627
  %v1629 = vrot.slane %v1535, %v1628
  %v1630 = vmul.f32 %v16, %v1629
  %v1631 = vlaneseq
  %v1632 = vshrl.u32 %v1631, 7
  %v1633 = vsub.s32 4, %v1632
  %v1634 = vrot.slane %v1541, %v1633
  %v1635 = vmul.f32 %v17, %v1634
  %v1636 = vadd.f32 %v1630, %v1635
  %v1637 = vlaneseq
  %v1638 = vshrl.u32 %v1637, 7
  %v1639 = vsub.s32 4, %v1638
  %v1640 = vrot.slane %v1547, %v1639
  %v1641 = vmul.f32 %v18, %v1640
  %v1642 = vadd.f32 %v1636, %v1641
  %v1643 = vlaneseq
  %v1644 = vshrl.u32 %v1643, 7
  %v1645 = vsub.s32 4, %v1644
  %v1646 = vrot.slane %v1481, %v1645
  %v1647 = vmul.f32 %v19, %v1646
  %v1648 = vadd.f32 %v1642, %v1647
  %v1649 = vadd.f32 %v1625, %v20
  %v1650 = vadd.f32 %v1649, %v1648
  %v1651 = vsub.f32 %v1578, %v1650
  %1652 = vst [vmem:[%s1] sm:$0xff] %v1651
  // Predicated region
  $region6: #{opt_layer_forward.1} parent=0 // pred_check
    _
  $region7: #{opt_layer_forward.1} parent=0 // pred_check_branch
    %1654 = sbr.rel (0) target = $region9
  $region8: #{opt_layer_forward.1} parent=0 // pred_region
    _
  $region9: #{opt_layer_forward.1} parent=0 // pred_fallthru
    _
  // Predicated region
  $region10: #{opt_layer_forward.1} parent=0 // pred_check
    _
  $region11: #{opt_layer_forward.1} parent=0 // pred_check_branch
    %1656 = sbr.rel (0) target = $region13
  $region12: #{opt_layer_forward.1} parent=0 // pred_region
    _
  $region13: #{opt_layer_forward.1} parent=0 // pred_fallthru
    _

</llo_original>
